<compile_context>
chip_gen: v7x
topology: tpu7x:2x2x1
jax: 0.10.0
libtpu: 0.0.40
codegen_flags: <defaults>
</compile_context>

<pallas_src>
from functools import partial

import jax
import jax.numpy as jnp
from jax.experimental import pallas as pl
from jax.experimental.pallas import tpu as pltpu


def _layernorm(x, g, eps=1e-5):
    # Matches the module's LayerNorm: biased var, no bias term, per-dim gain g.
    mean = jnp.mean(x, axis=-1, keepdims=True)
    var = jnp.mean((x - mean) ** 2, axis=-1, keepdims=True)
    return (x - mean) * jax.lax.rsqrt(var + eps) * g


def cross_attention_kernel(x_ref, ctx_ref, g_norm_ref, wq_ref, wkv_ref,
                           null_ref, wo_ref, g_out_ref, o_ref,
                           *, heads, dim_head, tq, kv_len, kv_pad, dim, cdim):
    # TODO(synk): optional `mask` argument (mask=None path only) is not implemented.
    inner = heads * dim_head
    bf = jnp.bfloat16

    # ---- LayerNorm(x) in f32 (VPU); norm_context is Identity ----
    x = x_ref[...].reshape(tq, dim).astype(jnp.float32)
    xn = _layernorm(x, g_norm_ref[...])                        # (tq, dim) f32
    ctx = ctx_ref[...].reshape(kv_pad, cdim).astype(bf)        # (kv_pad, cdim)

    # ---- lane-dense fused projections (bf16 MXU operands, f32 accumulate) ----
    # scale is pre-folded into wq by the wrapper; wkv stays fused (K and V).
    q2 = jnp.dot(xn.astype(bf), wq_ref[...],
                 preferred_element_type=jnp.float32)           # (tq, inner)
    kv2 = jnp.dot(ctx, wkv_ref[...],
                  preferred_element_type=jnp.float32)          # (kv_pad, 2*inner)
    q2 = q2.astype(bf)
    kv2 = kv2.astype(bf)

    # ---- relayout to per-head batched operands: static lane slices + stack ----
    q3 = jnp.stack([q2[:, h * dim_head:(h + 1) * dim_head]
                    for h in range(heads)], axis=0)            # (h, tq, d) bf16
    k3 = jnp.stack([kv2[:, h * dim_head:(h + 1) * dim_head]
                    for h in range(heads)], axis=0)            # (h, kv_pad, d)
    v3 = jnp.stack([kv2[:, inner + h * dim_head: inner + (h + 1) * dim_head]
                    for h in range(heads)], axis=0)            # (h, kv_pad, d)

    # Fold the learned null key/value into row 0 (context row 0 is a zero pad
    # and to_kv has no bias, so its projection is exactly zero).  One hoisted
    # mask, reused for K and V, applied to the bf16 matmul operands.
    nul = null_ref[...]                                        # (2, 1, d) bf16
    row0 = jax.lax.broadcasted_iota(jnp.int32, (1, kv_pad, 1), 1) == 0
    k3 = jnp.where(row0, nul[0:1], k3)
    v3 = jnp.where(row0, nul[1:2], v3)

    # ---- attention: two batched MXU matmuls, f32 softmax ----
    sim = jax.lax.dot_general(q3, k3, (((2,), (2,)), ((0,), (0,))),
                              preferred_element_type=jnp.float32)  # (h, tq, kv_pad)

    if kv_pad > kv_len:                                        # mask zero-padded keys
        keep = jax.lax.broadcasted_iota(jnp.int32, (1, 1, kv_pad), 2) < kv_len
        sim = jnp.where(keep, sim, -1e30)

    sim_max = jnp.max(sim, axis=-1, keepdims=True)
    p = jnp.exp(sim - sim_max)
    attn = (p * pl.reciprocal(jnp.sum(p, axis=-1, keepdims=True),
                              approx=True)).astype(bf)

    out = jax.lax.dot_general(attn, v3, (((2,), (1,)), ((0,), (0,))),
                              preferred_element_type=jnp.float32)  # (h, tq, d)

    # ---- output projection (per-head batched) + head-sum + LayerNorm ----
    # TODO(synk): head-sum stays a major-axis VPU reduce; the MXU-fused variant
    # needs a lane-axis concat relayout that Mosaic does not reliably lower.
    o_h = jax.lax.dot_general(out.astype(bf), wo_ref[...],
                              (((2,), (1,)), ((0,), (0,))),
                              preferred_element_type=jnp.float32)  # (h, tq, dim)
    o = jnp.sum(o_h, axis=0)                                   # (tq, dim) f32
    o = _layernorm(o, g_out_ref[...])                          # LayerNorm in to_out
    o_ref[...] = o.reshape(1, tq, dim).astype(o_ref.dtype)


def _choose_q_tile(n, dim, cdim, kv_pad, heads, dim_head,
                   budget_bytes=12 * 1024 * 1024, max_tile=256):
    """Largest query tile (multiple of 8 dividing n, <= max_tile) whose rough
    per-grid-step VMEM footprint fits the budget.  Falls back to the smallest
    legal tile, or the full sequence when n has no multiple-of-8 divisor."""
    inner = heads * dim_head

    def footprint(t):
        return 4 * (2 * t * dim                 # x tile, double buffered (f32)
                    + 2 * t * dim               # out tile, double buffered
                    + 2 * kv_pad * cdim         # ctx tile, double buffered
                    + 2 * t * inner             # q projection + per-head stack
                    + 3 * kv_pad * 2 * inner    # kv projection + k/v stacks
                    + 2 * heads * t * kv_pad    # sim + attn
                    + heads * t * dim_head      # attn @ v
                    + heads * t * dim           # per-head output projection
                    + 2 * t * dim)              # head-sum + layernorm temps

    cands = [t for t in range(8, min(n, max_tile) + 1, 8) if n % t == 0]
    for t in sorted(cands, reverse=True):
        if footprint(t) <= budget_bytes:
            return t
    return cands[0] if cands else n


def cross_attention(x, context, params, *, heads, dim_head, q_block=None):
    b, n, dim = x.shape
    _, m, cdim = context.shape
    inner = heads * dim_head
    scale = dim_head ** (-0.5)
    bf = jnp.bfloat16

    # Key axis: slot 0 reserved for the learned null kv, then the m context
    # rows, zero-padded up to a multiple of 8 sublanes (masked in-kernel).
    kv_len = m + 1
    kv_pad = ((kv_len + 7) // 8) * 8
    ctx_p = jnp.pad(context, ((0, 0), (1, kv_pad - kv_len), (0, 0)))

    # Query tiling from a per-step VMEM budget; batch block is fixed at 1 so
    # the grid has b * (n // tq) steps -> deep pipelining + v7x megacore work.
    tq = q_block if q_block is not None else _choose_q_tile(
        n, dim, cdim, kv_pad, heads, dim_head)
    assert n % tq == 0, f"query tile {tq} must divide n={n}"
    assert tq == n or tq % 8 == 0, f"query tile {tq} must be a multiple of 8"
    grid = (b, n // tq)

    # Pre-arranged weights (plain XLA, free): scale folded into wq; wkv kept
    # fused; wo laid out per head for the batched output projection.
    wq_s = (params["wq"] * scale).astype(bf)                       # (dim, inner)
    wkv = params["wkv"].astype(bf)                                 # (cdim, 2*inner)
    wo3 = params["wo"].reshape(heads, dim_head, dim).astype(bf)    # (h, d, dim)
    g_norm = params["g_norm"].reshape(1, dim).astype(jnp.float32)
    g_out = params["g_out"].reshape(1, dim).astype(jnp.float32)
    null_kv = params["null_kv"].reshape(2, 1, dim_head).astype(bf)

    kernel = partial(cross_attention_kernel,
                     heads=heads, dim_head=dim_head, tq=tq,
                     kv_len=kv_len, kv_pad=kv_pad, dim=dim, cdim=cdim)

    return pl.pallas_call(
        kernel,
        out_shape=jax.ShapeDtypeStruct((b, n, dim), x.dtype),
        grid=grid,
        in_specs=[
            pl.BlockSpec((1, tq, dim), lambda i, j: (i, j, 0)),           # x
            pl.BlockSpec((1, kv_pad, cdim), lambda i, j: (i, 0, 0)),      # padded ctx
            pl.BlockSpec((1, dim), lambda i, j: (0, 0)),                  # norm gain
            pl.BlockSpec((dim, inner), lambda i, j: (0, 0)),              # wq * scale
            pl.BlockSpec((cdim, 2 * inner), lambda i, j: (0, 0)),         # fused wkv
            pl.BlockSpec((2, 1, dim_head), lambda i, j: (0, 0, 0)),       # null_kv
            pl.BlockSpec((heads, dim_head, dim), lambda i, j: (0, 0, 0)), # wo per head
            pl.BlockSpec((1, dim), lambda i, j: (0, 0)),                  # out norm gain
        ],
        out_specs=pl.BlockSpec((1, tq, dim), lambda i, j: (i, j, 0)),
        compiler_params=pltpu.CompilerParams(
            dimension_semantics=("parallel", "parallel"),
            vmem_limit_bytes=32 * 1024 * 1024),
    )(x, ctx_p, g_norm, wq_s, wkv, null_kv, wo3, g_out)


def cross_attention_ref(x, context, params, *, heads, dim_head):
    # Pure-JAX f32 reference mirroring the PyTorch forward, for validation.
    b, n, dim = x.shape
    inner = heads * dim_head
    scale = dim_head ** (-0.5)

    def ln(t, g):
        mean = jnp.mean(t, -1, keepdims=True)
        var = jnp.mean((t - mean) ** 2, -1, keepdims=True)
        return (t - mean) * jax.lax.rsqrt(var + 1e-5) * g

    xn = ln(x, params["g_norm"][0])
    q = xn @ params["wq"]
    kv = context @ params["wkv"]
    k, v = kv[..., :inner], kv[..., inner:]

    def split_heads(t):
        return t.reshape(b, -1, heads, dim_head).transpose(0, 2, 1, 3)

    q, k, v = map(split_heads, (q, k, v))
    nk = jnp.broadcast_to(params["null_kv"][0], (b, heads, 1, dim_head))
    nv = jnp.broadcast_to(params["null_kv"][1], (b, heads, 1, dim_head))
    k = jnp.concatenate([nk, k], axis=2)
    v = jnp.concatenate([nv, v], axis=2)
    sim = jnp.einsum("bhid,bhjd->bhij", q * scale, k)
    attn = jax.nn.softmax(sim.astype(jnp.float32), axis=-1)
    out = jnp.einsum("bhij,bhjd->bhid", attn, v)
    out = out.transpose(0, 2, 1, 3).reshape(b, n, inner)
    o = out @ params["wo"]
    return ln(o, params["g_out"][0])


if __name__ == "__main__":
    # Small config consistent with the module's __init__.
    dim = 32
    context_dim = 32
    heads = 4
    dim_head = 16
    inner = heads * dim_head

    batch, n_q, n_kv = 2, 8, 6

    key = jax.random.PRNGKey(0)
    k_x, k_c, k_q, k_kv, k_o, k_null = jax.random.split(key, 6)

    x = jax.random.normal(k_x, (batch, n_q, dim), dtype=jnp.float32)
    context = jax.random.normal(k_c, (batch, n_kv, context_dim), dtype=jnp.float32)

    params = {
        "g_norm": jnp.ones((1, dim), jnp.float32),            # LayerNorm gain
        "g_out": jnp.ones((1, dim), jnp.float32),             # to_out LayerNorm gain
        "wq": jax.random.normal(k_q, (dim, inner), jnp.float32) * 0.05,
        "wkv": jax.random.normal(k_kv, (context_dim, 2 * inner), jnp.float32) * 0.05,
        "wo": jax.random.normal(k_o, (inner, dim), jnp.float32) * 0.05,
        "null_kv": jax.random.normal(k_null, (2, dim_head), jnp.float32),
    }

    out = cross_attention(x, context, params, heads=heads, dim_head=dim_head)
    out = jax.block_until_ready(out)

    ref = cross_attention_ref(x, context, params, heads=heads, dim_head=dim_head)
    assert out.shape == (batch, n_q, dim)
    # bf16 MXU operands (f32 accumulation) vs. pure-f32 reference -> 2e-2 tolerance.
    assert jnp.allclose(out, ref, rtol=2e-2, atol=2e-2), "mismatch vs JAX reference"

    print("KERNEL_OK")
</pallas_src>

<mosaic_0001>
module attributes {stable_mosaic.version = 11 : i64} {
  func.func @cross_attention_kernel(%arg0: i32, %arg1: i32, %arg2: memref<1x8x32xf32, #tpu.memory_space<vmem>>, %arg3: memref<1x8x32xf32, #tpu.memory_space<vmem>>, %arg4: memref<1x32xf32, #tpu.memory_space<vmem>>, %arg5: memref<32x64xbf16, #tpu.memory_space<vmem>>, %arg6: memref<32x128xbf16, #tpu.memory_space<vmem>>, %arg7: memref<2x1x16xbf16, #tpu.memory_space<vmem>>, %arg8: memref<4x16x32xbf16, #tpu.memory_space<vmem>>, %arg9: memref<1x32xf32, #tpu.memory_space<vmem>>, %arg10: memref<1x8x32xf32, #tpu.memory_space<vmem>>) attributes {dimension_semantics = [#tpu.dimension_semantics<parallel>, #tpu.dimension_semantics<parallel>], iteration_bounds = array<i64: 2, 1>, scalar_prefetch = 0 : i64, scratch_operands = 0 : i64, tpu.core_type = #tpu.core_type<tc>, window_params = [{transform_indices = @transform_0, window_bounds = array<i64: 1, 8, 32>}, {transform_indices = @transform_1, window_bounds = array<i64: 1, 8, 32>}, {pipeline_mode = #tpu.pipeline_mode<synchronous>, transform_indices = @transform_2, window_bounds = array<i64: 1, 32>}, {pipeline_mode = #tpu.pipeline_mode<synchronous>, transform_indices = @transform_3, window_bounds = array<i64: 32, 64>}, {pipeline_mode = #tpu.pipeline_mode<synchronous>, transform_indices = @transform_4, window_bounds = array<i64: 32, 128>}, {pipeline_mode = #tpu.pipeline_mode<synchronous>, transform_indices = @transform_5, window_bounds = array<i64: 2, 1, 16>}, {pipeline_mode = #tpu.pipeline_mode<synchronous>, transform_indices = @transform_6, window_bounds = array<i64: 4, 16, 32>}, {pipeline_mode = #tpu.pipeline_mode<synchronous>, transform_indices = @transform_7, window_bounds = array<i64: 1, 32>}, {transform_indices = @transform_8, window_bounds = array<i64: 1, 8, 32>}]} {
    %c0 = arith.constant 0 : index
    %c0_0 = arith.constant 0 : index
    %c0_1 = arith.constant 0 : index
    %0 = vector.load %arg2[%c0, %c0_0, %c0_1] : memref<1x8x32xf32, #tpu.memory_space<vmem>>, vector<1x8x32xf32>
    %1 = vector.shape_cast %0 : vector<1x8x32xf32> to vector<8x32xf32>
    %c0_2 = arith.constant 0 : index
    %c0_3 = arith.constant 0 : index
    %2 = vector.load %arg4[%c0_2, %c0_3] : memref<1x32xf32, #tpu.memory_space<vmem>>, vector<1x32xf32>
    %cst = arith.constant dense<0.000000e+00> : vector<8xf32>
    %3 = vector.multi_reduction <add>, %1, %cst [1] : vector<8x32xf32> to vector<8xf32>
    %4 = vector.shape_cast %3 : vector<8xf32> to vector<8x1xf32>
    %cst_4 = arith.constant 3.200000e+01 : f32
    %5 = vector.broadcast %cst_4 : f32 to vector<8x1xf32>
    %6 = arith.divf %4, %5 : vector<8x1xf32>
    %7 = vector.broadcast %6 : vector<8x1xf32> to vector<8x32xf32>
    %8 = arith.subf %1, %7 : vector<8x32xf32>
    %9 = arith.mulf %8, %8 : vector<8x32xf32>
    %cst_5 = arith.constant dense<0.000000e+00> : vector<8xf32>
    %10 = vector.multi_reduction <add>, %9, %cst_5 [1] : vector<8x32xf32> to vector<8xf32>
    %11 = vector.shape_cast %10 : vector<8xf32> to vector<8x1xf32>
    %cst_6 = arith.constant 3.200000e+01 : f32
    %12 = vector.broadcast %cst_6 : f32 to vector<8x1xf32>
    %13 = arith.divf %11, %12 : vector<8x1xf32>
    %14 = vector.broadcast %6 : vector<8x1xf32> to vector<8x32xf32>
    %15 = arith.subf %1, %14 : vector<8x32xf32>
    %cst_7 = arith.constant 9.99999974E-6 : f32
    %16 = vector.broadcast %cst_7 : f32 to vector<8x1xf32>
    %17 = arith.addf %13, %16 : vector<8x1xf32>
    %18 = math.rsqrt %17 : vector<8x1xf32>
    %19 = vector.broadcast %18 : vector<8x1xf32> to vector<8x32xf32>
    %20 = arith.mulf %15, %19 : vector<8x32xf32>
    %21 = vector.broadcast %2 : vector<1x32xf32> to vector<8x32xf32>
    %22 = arith.mulf %20, %21 : vector<8x32xf32>
    %c0_8 = arith.constant 0 : index
    %c0_9 = arith.constant 0 : index
    %c0_10 = arith.constant 0 : index
    %23 = vector.load %arg3[%c0_8, %c0_9, %c0_10] : memref<1x8x32xf32, #tpu.memory_space<vmem>>, vector<1x8x32xf32>
    %24 = vector.shape_cast %23 : vector<1x8x32xf32> to vector<8x32xf32>
    %25 = arith.truncf %24 : vector<8x32xf32> to vector<8x32xbf16>
    %26 = arith.truncf %22 : vector<8x32xf32> to vector<8x32xbf16>
    %c0_11 = arith.constant 0 : index
    %c0_12 = arith.constant 0 : index
    %27 = vector.load %arg5[%c0_11, %c0_12] : memref<32x64xbf16, #tpu.memory_space<vmem>>, vector<32x64xbf16>
    %cst_13 = arith.constant dense<0.000000e+00> : vector<8x64xf32>
    %28 = tpu.matmul %26, %27, %cst_13 {dimension_numbers = #tpu.dot_dimension_numbers<[1], [0], [0], [1], [0, 0, 1, 1], [], []>} : vector<8x32xbf16>, vector<32x64xbf16>, vector<8x64xf32> -> vector<8x64xf32>
    %c0_14 = arith.constant 0 : index
    %c0_15 = arith.constant 0 : index
    %29 = vector.load %arg6[%c0_14, %c0_15] : memref<32x128xbf16, #tpu.memory_space<vmem>>, vector<32x128xbf16>
    %cst_16 = arith.constant dense<0.000000e+00> : vector<8x128xf32>
    %30 = tpu.matmul %25, %29, %cst_16 {dimension_numbers = #tpu.dot_dimension_numbers<[1], [0], [0], [1], [0, 0, 1, 1], [], []>} : vector<8x32xbf16>, vector<32x128xbf16>, vector<8x128xf32> -> vector<8x128xf32>
    %31 = arith.truncf %28 : vector<8x64xf32> to vector<8x64xbf16>
    %32 = arith.truncf %30 : vector<8x128xf32> to vector<8x128xbf16>
    %33 = vector.extract_strided_slice %31 {offsets = [0, 0], sizes = [8, 16], strides = [1, 1]} : vector<8x64xbf16> to vector<8x16xbf16>
    %34 = vector.extract_strided_slice %31 {offsets = [0, 16], sizes = [8, 16], strides = [1, 1]} : vector<8x64xbf16> to vector<8x16xbf16>
    %35 = vector.extract_strided_slice %31 {offsets = [0, 32], sizes = [8, 16], strides = [1, 1]} : vector<8x64xbf16> to vector<8x16xbf16>
    %36 = vector.extract_strided_slice %31 {offsets = [0, 48], sizes = [8, 16], strides = [1, 1]} : vector<8x64xbf16> to vector<8x16xbf16>
    %37 = vector.shape_cast %33 : vector<8x16xbf16> to vector<1x8x16xbf16>
    %38 = vector.shape_cast %34 : vector<8x16xbf16> to vector<1x8x16xbf16>
    %39 = vector.shape_cast %35 : vector<8x16xbf16> to vector<1x8x16xbf16>
    %40 = vector.shape_cast %36 : vector<8x16xbf16> to vector<1x8x16xbf16>
    %41 = tpu.concatenate %37, %38, %39, %40 in 0 : vector<1x8x16xbf16>, vector<1x8x16xbf16>, vector<1x8x16xbf16>, vector<1x8x16xbf16> -> vector<4x8x16xbf16>
    %42 = vector.extract_strided_slice %32 {offsets = [0, 0], sizes = [8, 16], strides = [1, 1]} : vector<8x128xbf16> to vector<8x16xbf16>
    %43 = vector.extract_strided_slice %32 {offsets = [0, 16], sizes = [8, 16], strides = [1, 1]} : vector<8x128xbf16> to vector<8x16xbf16>
    %44 = vector.extract_strided_slice %32 {offsets = [0, 32], sizes = [8, 16], strides = [1, 1]} : vector<8x128xbf16> to vector<8x16xbf16>
    %45 = vector.extract_strided_slice %32 {offsets = [0, 48], sizes = [8, 16], strides = [1, 1]} : vector<8x128xbf16> to vector<8x16xbf16>
    %46 = vector.shape_cast %42 : vector<8x16xbf16> to vector<1x8x16xbf16>
    %47 = vector.shape_cast %43 : vector<8x16xbf16> to vector<1x8x16xbf16>
    %48 = vector.shape_cast %44 : vector<8x16xbf16> to vector<1x8x16xbf16>
    %49 = vector.shape_cast %45 : vector<8x16xbf16> to vector<1x8x16xbf16>
    %50 = tpu.concatenate %46, %47, %48, %49 in 0 : vector<1x8x16xbf16>, vector<1x8x16xbf16>, vector<1x8x16xbf16>, vector<1x8x16xbf16> -> vector<4x8x16xbf16>
    %51 = vector.extract_strided_slice %32 {offsets = [0, 64], sizes = [8, 16], strides = [1, 1]} : vector<8x128xbf16> to vector<8x16xbf16>
    %52 = vector.extract_strided_slice %32 {offsets = [0, 80], sizes = [8, 16], strides = [1, 1]} : vector<8x128xbf16> to vector<8x16xbf16>
    %53 = vector.extract_strided_slice %32 {offsets = [0, 96], sizes = [8, 16], strides = [1, 1]} : vector<8x128xbf16> to vector<8x16xbf16>
    %54 = vector.extract_strided_slice %32 {offsets = [0, 112], sizes = [8, 16], strides = [1, 1]} : vector<8x128xbf16> to vector<8x16xbf16>
    %55 = vector.shape_cast %51 : vector<8x16xbf16> to vector<1x8x16xbf16>
    %56 = vector.shape_cast %52 : vector<8x16xbf16> to vector<1x8x16xbf16>
    %57 = vector.shape_cast %53 : vector<8x16xbf16> to vector<1x8x16xbf16>
    %58 = vector.shape_cast %54 : vector<8x16xbf16> to vector<1x8x16xbf16>
    %59 = tpu.concatenate %55, %56, %57, %58 in 0 : vector<1x8x16xbf16>, vector<1x8x16xbf16>, vector<1x8x16xbf16>, vector<1x8x16xbf16> -> vector<4x8x16xbf16>
    %c0_17 = arith.constant 0 : index
    %c0_18 = arith.constant 0 : index
    %c0_19 = arith.constant 0 : index
    %60 = vector.load %arg7[%c0_17, %c0_18, %c0_19] : memref<2x1x16xbf16, #tpu.memory_space<vmem>>, vector<2x1x16xbf16>
    %61 = tpu.iota {dimensions = array<i32: 1>} : vector<1x8x1xi32>
    %c0_i32 = arith.constant 0 : i32
    %62 = vector.broadcast %c0_i32 : i32 to vector<1x8x1xi32>
    %63 = arith.cmpi eq, %61, %62 : vector<1x8x1xi32>
    %64 = vector.extract_strided_slice %60 {offsets = [0, 0, 0], sizes = [1, 1, 16], strides = [1, 1, 1]} : vector<2x1x16xbf16> to vector<1x1x16xbf16>
    %65 = vector.shape_cast %63 : vector<1x8x1xi1> to vector<1x8x1xi1>
    %66 = vector.broadcast %65 : vector<1x8x1xi1> to vector<4x8x16xi1>
    %67 = vector.shape_cast %64 : vector<1x1x16xbf16> to vector<1x1x16xbf16>
    %68 = vector.broadcast %67 : vector<1x1x16xbf16> to vector<4x8x16xbf16>
    %69 = arith.select %66, %68, %50 : vector<4x8x16xi1>, vector<4x8x16xbf16>
    %70 = vector.extract_strided_slice %60 {offsets = [1, 0, 0], sizes = [1, 1, 16], strides = [1, 1, 1]} : vector<2x1x16xbf16> to vector<1x1x16xbf16>
    %71 = vector.shape_cast %63 : vector<1x8x1xi1> to vector<1x8x1xi1>
    %72 = vector.broadcast %71 : vector<1x8x1xi1> to vector<4x8x16xi1>
    %73 = vector.shape_cast %70 : vector<1x1x16xbf16> to vector<1x1x16xbf16>
    %74 = vector.broadcast %73 : vector<1x1x16xbf16> to vector<4x8x16xbf16>
    %75 = arith.select %72, %74, %59 : vector<4x8x16xi1>, vector<4x8x16xbf16>
    %cst_20 = arith.constant dense<0.000000e+00> : vector<4x8x8xf32>
    %76 = tpu.matmul %41, %69, %cst_20 {dimension_numbers = #tpu.dot_dimension_numbers<[2], [2], [1], [1], [0, 0, 0, 1, 1, 1], [0], [0]>} : vector<4x8x16xbf16>, vector<4x8x16xbf16>, vector<4x8x8xf32> -> vector<4x8x8xf32>
    %77 = tpu.iota {dimensions = array<i32: 2>} : vector<1x1x8xi32>
    %c7_i32 = arith.constant 7 : i32
    %78 = vector.broadcast %c7_i32 : i32 to vector<1x1x8xi32>
    %79 = arith.cmpi slt, %77, %78 : vector<1x1x8xi32>
    %cst_21 = arith.constant -1.000000e+30 : f32
    %80 = vector.shape_cast %79 : vector<1x1x8xi1> to vector<1x1x8xi1>
    %81 = vector.broadcast %80 : vector<1x1x8xi1> to vector<4x8x8xi1>
    %82 = vector.broadcast %cst_21 : f32 to vector<4x8x8xf32>
    %83 = arith.select %81, %76, %82 : vector<4x8x8xi1>, vector<4x8x8xf32>
    %cst_22 = arith.constant dense<0xFF800000> : vector<4x8xf32>
    %84 = vector.multi_reduction <maximumf>, %83, %cst_22 [2] : vector<4x8x8xf32> to vector<4x8xf32>
    %85 = vector.shape_cast %84 : vector<4x8xf32> to vector<4x8x1xf32>
    %86 = vector.broadcast %85 : vector<4x8x1xf32> to vector<4x8x8xf32>
    %87 = arith.subf %83, %86 : vector<4x8x8xf32>
    %88 = math.exp %87 : vector<4x8x8xf32>
    %cst_23 = arith.constant dense<0.000000e+00> : vector<4x8xf32>
    %89 = vector.multi_reduction <add>, %88, %cst_23 [2] : vector<4x8x8xf32> to vector<4x8xf32>
    %90 = vector.shape_cast %89 : vector<4x8xf32> to vector<4x8x1xf32>
    %91 = tpu.reciprocal %90 {approx = true} : vector<4x8x1xf32> -> vector<4x8x1xf32>
    %92 = vector.broadcast %91 : vector<4x8x1xf32> to vector<4x8x8xf32>
    %93 = arith.mulf %88, %92 : vector<4x8x8xf32>
    %94 = arith.truncf %93 : vector<4x8x8xf32> to vector<4x8x8xbf16>
    %cst_24 = arith.constant dense<0.000000e+00> : vector<4x8x16xf32>
    %95 = tpu.matmul %94, %75, %cst_24 {dimension_numbers = #tpu.dot_dimension_numbers<[2], [1], [1], [2], [0, 0, 0, 1, 1, 2], [0], [0]>} : vector<4x8x8xbf16>, vector<4x8x16xbf16>, vector<4x8x16xf32> -> vector<4x8x16xf32>
    %96 = arith.truncf %95 : vector<4x8x16xf32> to vector<4x8x16xbf16>
    %c0_25 = arith.constant 0 : index
    %c0_26 = arith.constant 0 : index
    %c0_27 = arith.constant 0 : index
    %97 = vector.load %arg8[%c0_25, %c0_26, %c0_27] : memref<4x16x32xbf16, #tpu.memory_space<vmem>>, vector<4x16x32xbf16>
    %cst_28 = arith.constant dense<0.000000e+00> : vector<4x8x32xf32>
    %98 = tpu.matmul %96, %97, %cst_28 {dimension_numbers = #tpu.dot_dimension_numbers<[2], [1], [1], [2], [0, 0, 0, 1, 1, 2], [0], [0]>} : vector<4x8x16xbf16>, vector<4x16x32xbf16>, vector<4x8x32xf32> -> vector<4x8x32xf32>
    %cst_29 = arith.constant dense<0.000000e+00> : vector<8x32xf32>
    %99 = vector.multi_reduction <add>, %98, %cst_29 [0] : vector<4x8x32xf32> to vector<8x32xf32>
    %c0_30 = arith.constant 0 : index
    %c0_31 = arith.constant 0 : index
    %100 = vector.load %arg9[%c0_30, %c0_31] : memref<1x32xf32, #tpu.memory_space<vmem>>, vector<1x32xf32>
    %cst_32 = arith.constant dense<0.000000e+00> : vector<8xf32>
    %101 = vector.multi_reduction <add>, %99, %cst_32 [1] : vector<8x32xf32> to vector<8xf32>
    %102 = vector.shape_cast %101 : vector<8xf32> to vector<8x1xf32>
    %cst_33 = arith.constant 3.200000e+01 : f32
    %103 = vector.broadcast %cst_33 : f32 to vector<8x1xf32>
    %104 = arith.divf %102, %103 : vector<8x1xf32>
    %105 = vector.broadcast %104 : vector<8x1xf32> to vector<8x32xf32>
    %106 = arith.subf %99, %105 : vector<8x32xf32>
    %107 = arith.mulf %106, %106 : vector<8x32xf32>
    %cst_34 = arith.constant dense<0.000000e+00> : vector<8xf32>
    %108 = vector.multi_reduction <add>, %107, %cst_34 [1] : vector<8x32xf32> to vector<8xf32>
    %109 = vector.shape_cast %108 : vector<8xf32> to vector<8x1xf32>
    %cst_35 = arith.constant 3.200000e+01 : f32
    %110 = vector.broadcast %cst_35 : f32 to vector<8x1xf32>
    %111 = arith.divf %109, %110 : vector<8x1xf32>
    %112 = vector.broadcast %104 : vector<8x1xf32> to vector<8x32xf32>
    %113 = arith.subf %99, %112 : vector<8x32xf32>
    %cst_36 = arith.constant 9.99999974E-6 : f32
    %114 = vector.broadcast %cst_36 : f32 to vector<8x1xf32>
    %115 = arith.addf %111, %114 : vector<8x1xf32>
    %116 = math.rsqrt %115 : vector<8x1xf32>
    %117 = vector.broadcast %116 : vector<8x1xf32> to vector<8x32xf32>
    %118 = arith.mulf %113, %117 : vector<8x32xf32>
    %119 = vector.broadcast %100 : vector<1x32xf32> to vector<8x32xf32>
    %120 = arith.mulf %118, %119 : vector<8x32xf32>
    %121 = vector.shape_cast %120 : vector<8x32xf32> to vector<1x8x32xf32>
    %c0_37 = arith.constant 0 : index
    %c0_38 = arith.constant 0 : index
    %c0_39 = arith.constant 0 : index
    %122 = vector.load %arg10[%c0_37, %c0_38, %c0_39] : memref<1x8x32xf32, #tpu.memory_space<vmem>>, vector<1x8x32xf32>
    tpu.vector_store %arg10[%c0_37, %c0_38, %c0_39], %121 {strides = array<i32>} : memref<1x8x32xf32, #tpu.memory_space<vmem>>, vector<1x8x32xf32>,
    return
  }
  func.func @transform_0(%arg0: i32, %arg1: i32) -> (i32, i32, i32) {
    %c0_i32 = arith.constant 0 : i32
    %c0_i32_0 = arith.constant 0 : i32
    return %arg0, %arg1, %c0_i32 : i32, i32, i32
  }
  func.func @transform_1(%arg0: i32, %arg1: i32) -> (i32, i32, i32) {
    %c0_i32 = arith.constant 0 : i32
    %c0_i32_0 = arith.constant 0 : i32
    %c0_i32_1 = arith.constant 0 : i32
    return %arg0, %c0_i32, %c0_i32_0 : i32, i32, i32
  }
  func.func @transform_2(%arg0: i32, %arg1: i32) -> (i32, i32) {
    %c0_i32 = arith.constant 0 : i32
    %c0_i32_0 = arith.constant 0 : i32
    %c0_i32_1 = arith.constant 0 : i32
    return %c0_i32, %c0_i32_0 : i32, i32
  }
  func.func @transform_3(%arg0: i32, %arg1: i32) -> (i32, i32) {
    %c0_i32 = arith.constant 0 : i32
    %c0_i32_0 = arith.constant 0 : i32
    %c0_i32_1 = arith.constant 0 : i32
    return %c0_i32, %c0_i32_0 : i32, i32
  }
  func.func @transform_4(%arg0: i32, %arg1: i32) -> (i32, i32) {
    %c0_i32 = arith.constant 0 : i32
    %c0_i32_0 = arith.constant 0 : i32
    %c0_i32_1 = arith.constant 0 : i32
    return %c0_i32, %c0_i32_0 : i32, i32
  }
  func.func @transform_5(%arg0: i32, %arg1: i32) -> (i32, i32, i32) {
    %c0_i32 = arith.constant 0 : i32
    %c0_i32_0 = arith.constant 0 : i32
    %c0_i32_1 = arith.constant 0 : i32
    %c0_i32_2 = arith.constant 0 : i32
    return %c0_i32, %c0_i32_0, %c0_i32_1 : i32, i32, i32
  }
  func.func @transform_6(%arg0: i32, %arg1: i32) -> (i32, i32, i32) {
    %c0_i32 = arith.constant 0 : i32
    %c0_i32_0 = arith.constant 0 : i32
    %c0_i32_1 = arith.constant 0 : i32
    %c0_i32_2 = arith.constant 0 : i32
    return %c0_i32, %c0_i32_0, %c0_i32_1 : i32, i32, i32
  }
  func.func @transform_7(%arg0: i32, %arg1: i32) -> (i32, i32) {
    %c0_i32 = arith.constant 0 : i32
    %c0_i32_0 = arith.constant 0 : i32
    %c0_i32_1 = arith.constant 0 : i32
    return %c0_i32, %c0_i32_0 : i32, i32
  }
  func.func @transform_8(%arg0: i32, %arg1: i32) -> (i32, i32, i32) {
    %c0_i32 = arith.constant 0 : i32
    %c0_i32_0 = arith.constant 0 : i32
    return %arg0, %arg1, %c0_i32 : i32, i32, i32
  }
}

</mosaic_0001>

<llo_original>
// kernel: tpu_custom_call.1
$region0: #{tpu_custom_call.1}
  #allocation0 [shape = 'u32[]', space=smem, size = 0x4, offset = 0x4, fixed_abs, tag = 'smem constant byte address 0x4 - core index']
  #allocation1 [shape = 'u32[144,128]{1,0:T(1,128)}', space=vmem, size = 0x12000, scoped, tag = 'internal scratch']
  %s0 = inlined_call_operand.hbm [shape: f32[2,8,32], index: 0, kind: input, shape index: {}]
  %s1 = inlined_call_operand.hbm [shape: f32[2,8,32], index: 1, kind: input, shape index: {}]
  %s2 = inlined_call_operand.vmem [shape: f32[1,32], index: 2, kind: input, shape index: {}]
  %s3 = inlined_call_operand.hbm [shape: bf16[32,64], index: 3, kind: input, shape index: {}]
  %s4 = inlined_call_operand.vmem [shape: bf16[32,128], index: 4, kind: input, shape index: {}]
  %s5 = inlined_call_operand.vmem [shape: bf16[2,1,16], index: 5, kind: input, shape index: {}]
  %s6 = inlined_call_operand.hbm [shape: bf16[4,16,32], index: 6, kind: input, shape index: {}]
  %s7 = inlined_call_operand.vmem [shape: f32[1,32], index: 7, kind: input, shape index: {}]
  %s8 = inlined_call_operand.hbm [shape: f32[2,8,32], index: 8, kind: output, shape index: {}]
  %s9 = sld [smem:[#allocation0]]
  $region81: #{tpu_custom_call.1} parent=0
    _
  %s11 = ssub.s32 1, %s9
  %s12 = scalar_select 0, %s11, %s9
  $region1: #{tpu_custom_call.1} parent=0
    #allocation2 [shape = 'u8[8192]{0}', space=vmem, size = 0x2000, scoped, tag = 'input window, operand 0']
    #allocation3 [shape = 's32[2]{0}', space=sflag, size = 0x8, scoped, tag = 'scoped memory for tpu_custom_call.1']
    #allocation4 [shape = 's32[2]{0}', space=sflag, size = 0x8, scoped, tag = 'scoped memory for tpu_custom_call.1']
    #allocation5 [shape = 'u8[8192]{0}', space=vmem, size = 0x2000, scoped, tag = 'input window, operand 1']
    #allocation6 [shape = 's32[2]{0}', space=sflag, size = 0x8, scoped, tag = 'scoped memory for tpu_custom_call.1']
    #allocation7 [shape = 'u8[8192]{0}', space=vmem, size = 0x2000, scoped, tag = 'input window, operand 3, single buffered']
    #allocation8 [shape = 'u8[16384]{0}', space=vmem, size = 0x4000, scoped, tag = 'input window, operand 6, single buffered']
    #allocation9 [shape = 's32[1]{0}', space=sflag, size = 0x4, scoped, tag = 'scoped memory for tpu_custom_call.1']
    #allocation10 [shape = 'u8[8192]{0}', space=vmem, size = 0x2000, scoped, tag = 'output window, operand 0']
    %13 = vsyncpa [#allocation3], 0
    %s14 = scalar_lea.sflag [#allocation3], 1
    %15 = vsyncpa %s14, 0
    %16 = vsyncpa [#allocation6], 0
    %s17 = scalar_lea.sflag [#allocation6], 1
    %18 = vsyncpa %s17, 0
    %19 = vsyncpa [#allocation9], 0
    %20 = vsyncpa [#allocation4], 0
    %s21 = scalar_lea.sflag [#allocation4], 1
    %22 = vsyncpa %s21, 0
    loop: start=0, step=1, limit=4
    $region2: #{tpu_custom_call.1} parent=1 // loop_pre_header
      _
    $region3: #{tpu_custom_call.1} parent=1 // loop_header
      %s24 = sphi 0, %s28
      %p25 = scmp.ge.s32.totalorder %s24, 4
      %s31 = sphi 0, %s43
      %s32 = sphi 0, %s39
      %s33 = sphi 0, %s31
      %s34 = sphi 0, %s32
      %s35 = sphi 0, %s33
      %s36 = sphi 0, %s34
      %s48 = sphi 0, %s50
      %s51 = sphi 0, %s48
      %s52 = sphi 0, %s51
      %s68 = sphi 0, %s52
      %s74 = sphi 0, %s76
      %s77 = sphi 0, %s74
      %s78 = sphi 0, %s77
      %s94 = sphi 0, %s78
      %s98 = sphi 0, %s98
      %s100 = sphi 0, %s98
      %s101 = sphi 0, %s100
      %s115 = sphi 0, %s101
      %s119 = sphi 0, %s119
      %s121 = sphi 0, %s119
      %s122 = sphi 0, %s121
      %s136 = sphi 0, %s122
      %s140 = sphi 0, %s140
      %s142 = sphi 0, %s140
      %s143 = sphi 0, %s142
      %s157 = sphi 0, %s143
      %s161 = sphi 0, %s161
      %s163 = sphi 0, %s161
      %s164 = sphi 0, %s163
      %s178 = sphi 0, %s164
      %s182 = sphi 0, %s182
      %s184 = sphi 0, %s182
      %s185 = sphi 0, %s184
      %s199 = sphi 0, %s185
      %s203 = sphi 0, %s203
      %s205 = sphi 0, %s203
      %s206 = sphi 0, %s205
      %s220 = sphi 0, %s206
      %s228 = sphi 0, %s230
      %s231 = sphi 0, %s228
      %s232 = sphi 0, %s231
      %s248 = sphi 0, %s232
    $region4: #{tpu_custom_call.1} parent=1 // loop_header_branch
      %27 = sbr.rel (%p25) target = $region8
    $region5: #{tpu_custom_call.1} parent=1 // loop_body
      %s29 = ssub.s32 %s24, 1
      %s30 = ssub.s32 %s24, 2
      %s37 = sadd.s32 1, %s32
      %p38 = scmp.ge.s32.totalorder %s37, 1
      %s39 = scalar_select %p38, 0, %s37
      %s40 = sadd.s32 1, %s31
      %s41 = scalar_select %p38, %s40, %s31
      %p42 = scmp.ge.s32.totalorder %s41, 2
      %s43 = scalar_select %p42, 0, %s41
      %s44 = ssub.s32 %s31, %s43
      %s45 = ssub.s32 %s32, %s39
      %s46 = sor.u32 %s44, %s45
      %p47 = scmp.eq.s32.totalorder %s46, 0
      %s49 = sadd.s32 %s48, 1
      %s50 = scalar_select %p47, %s48, %s49
      %p53 = pneg %p47
      %p54 = scmp.eq.s32.totalorder %s24, 1
      %p55 = por %p53, %p54
      %p56 = scmp.ne.s32.totalorder %s48, %s51
      %p57 = scmp.eq.s32.totalorder %s24, 0
      %p58 = por %p56, %p57
      %p59 = scmp.ne.s32.totalorder %s48, %s51
      %p60 = scmp.eq.s32.totalorder %s29, 1
      %p61 = por %p59, %p60
      %p62 = scmp.ne.s32.totalorder %s51, %s52
      %p63 = scmp.eq.s32.totalorder %s29, 0
      %p64 = por %p62, %p63
      %p65 = scmp.ne.s32.totalorder %s51, %s52
      %p66 = scmp.eq.s32.totalorder %s30, 1
      %p67 = por %p65, %p66
      %p69 = scmp.ne.s32.totalorder %s52, %s68
      %p70 = scmp.eq.s32.totalorder %s30, 0
      %p71 = por %p69, %p70
      %s72 = ssub.s32 %s31, %s43
      %p73 = scmp.eq.s32.totalorder %s72, 0
      %s75 = sadd.s32 %s74, 1
      %s76 = scalar_select %p73, %s74, %s75
      %p79 = pneg %p73
      %p80 = scmp.eq.s32.totalorder %s24, 1
      %p81 = por %p79, %p80
      %p82 = scmp.ne.s32.totalorder %s74, %s77
      %p83 = scmp.eq.s32.totalorder %s24, 0
      %p84 = por %p82, %p83
      %p85 = scmp.ne.s32.totalorder %s74, %s77
      %p86 = scmp.eq.s32.totalorder %s29, 1
      %p87 = por %p85, %p86
      %p88 = scmp.ne.s32.totalorder %s77, %s78
      %p89 = scmp.eq.s32.totalorder %s29, 0
      %p90 = por %p88, %p89
      %p91 = scmp.ne.s32.totalorder %s77, %s78
      %p92 = scmp.eq.s32.totalorder %s30, 1
      %p93 = por %p91, %p92
      %p95 = scmp.ne.s32.totalorder %s78, %s94
      %p96 = scmp.eq.s32.totalorder %s30, 0
      %p97 = por %p95, %p96
      %s99 = sadd.s32 %s98, 1
      %p102 = scmp.eq.s32.totalorder %s24, 1
      %p103 = scmp.ne.s32.totalorder %s98, %s100
      %p104 = scmp.eq.s32.totalorder %s24, 0
      %p105 = por %p103, %p104
      %p106 = scmp.ne.s32.totalorder %s98, %s100
      %p107 = scmp.eq.s32.totalorder %s29, 1
      %p108 = por %p106, %p107
      %p109 = scmp.ne.s32.totalorder %s100, %s101
      %p110 = scmp.eq.s32.totalorder %s29, 0
      %p111 = por %p109, %p110
      %p112 = scmp.ne.s32.totalorder %s100, %s101
      %p113 = scmp.eq.s32.totalorder %s30, 1
      %p114 = por %p112, %p113
      %p116 = scmp.ne.s32.totalorder %s101, %s115
      %p117 = scmp.eq.s32.totalorder %s30, 0
      %p118 = por %p116, %p117
      %s120 = sadd.s32 %s119, 1
      %p123 = scmp.eq.s32.totalorder %s24, 1
      %p124 = scmp.ne.s32.totalorder %s119, %s121
      %p125 = scmp.eq.s32.totalorder %s24, 0
      %p126 = por %p124, %p125
      %p127 = scmp.ne.s32.totalorder %s119, %s121
      %p128 = scmp.eq.s32.totalorder %s29, 1
      %p129 = por %p127, %p128
      %p130 = scmp.ne.s32.totalorder %s121, %s122
      %p131 = scmp.eq.s32.totalorder %s29, 0
      %p132 = por %p130, %p131
      %p133 = scmp.ne.s32.totalorder %s121, %s122
      %p134 = scmp.eq.s32.totalorder %s30, 1
      %p135 = por %p133, %p134
      %p137 = scmp.ne.s32.totalorder %s122, %s136
      %p138 = scmp.eq.s32.totalorder %s30, 0
      %p139 = por %p137, %p138
      %s141 = sadd.s32 %s140, 1
      %p144 = scmp.eq.s32.totalorder %s24, 1
      %p145 = scmp.ne.s32.totalorder %s140, %s142
      %p146 = scmp.eq.s32.totalorder %s24, 0
      %p147 = por %p145, %p146
      %p148 = scmp.ne.s32.totalorder %s140, %s142
      %p149 = scmp.eq.s32.totalorder %s29, 1
      %p150 = por %p148, %p149
      %p151 = scmp.ne.s32.totalorder %s142, %s143
      %p152 = scmp.eq.s32.totalorder %s29, 0
      %p153 = por %p151, %p152
      %p154 = scmp.ne.s32.totalorder %s142, %s143
      %p155 = scmp.eq.s32.totalorder %s30, 1
      %p156 = por %p154, %p155
      %p158 = scmp.ne.s32.totalorder %s143, %s157
      %p159 = scmp.eq.s32.totalorder %s30, 0
      %p160 = por %p158, %p159
      %s162 = sadd.s32 %s161, 1
      %p165 = scmp.eq.s32.totalorder %s24, 1
      %p166 = scmp.ne.s32.totalorder %s161, %s163
      %p167 = scmp.eq.s32.totalorder %s24, 0
      %p168 = por %p166, %p167
      %p169 = scmp.ne.s32.totalorder %s161, %s163
      %p170 = scmp.eq.s32.totalorder %s29, 1
      %p171 = por %p169, %p170
      %p172 = scmp.ne.s32.totalorder %s163, %s164
      %p173 = scmp.eq.s32.totalorder %s29, 0
      %p174 = por %p172, %p173
      %p175 = scmp.ne.s32.totalorder %s163, %s164
      %p176 = scmp.eq.s32.totalorder %s30, 1
      %p177 = por %p175, %p176
      %p179 = scmp.ne.s32.totalorder %s164, %s178
      %p180 = scmp.eq.s32.totalorder %s30, 0
      %p181 = por %p179, %p180
      %s183 = sadd.s32 %s182, 1
      %p186 = scmp.eq.s32.totalorder %s24, 1
      %p187 = scmp.ne.s32.totalorder %s182, %s184
      %p188 = scmp.eq.s32.totalorder %s24, 0
      %p189 = por %p187, %p188
      %p190 = scmp.ne.s32.totalorder %s182, %s184
      %p191 = scmp.eq.s32.totalorder %s29, 1
      %p192 = por %p190, %p191
      %p193 = scmp.ne.s32.totalorder %s184, %s185
      %p194 = scmp.eq.s32.totalorder %s29, 0
      %p195 = por %p193, %p194
      %p196 = scmp.ne.s32.totalorder %s184, %s185
      %p197 = scmp.eq.s32.totalorder %s30, 1
      %p198 = por %p196, %p197
      %p200 = scmp.ne.s32.totalorder %s185, %s199
      %p201 = scmp.eq.s32.totalorder %s30, 0
      %p202 = por %p200, %p201
      %s204 = sadd.s32 %s203, 1
      %p207 = scmp.eq.s32.totalorder %s24, 1
      %p208 = scmp.ne.s32.totalorder %s203, %s205
      %p209 = scmp.eq.s32.totalorder %s24, 0
      %p210 = por %p208, %p209
      %p211 = scmp.ne.s32.totalorder %s203, %s205
      %p212 = scmp.eq.s32.totalorder %s29, 1
      %p213 = por %p211, %p212
      %p214 = scmp.ne.s32.totalorder %s205, %s206
      %p215 = scmp.eq.s32.totalorder %s29, 0
      %p216 = por %p214, %p215
      %p217 = scmp.ne.s32.totalorder %s205, %s206
      %p218 = scmp.eq.s32.totalorder %s30, 1
      %p219 = por %p217, %p218
      %p221 = scmp.ne.s32.totalorder %s206, %s220
      %p222 = scmp.eq.s32.totalorder %s30, 0
      %p223 = por %p221, %p222
      %s224 = ssub.s32 %s31, %s43
      %s225 = ssub.s32 %s32, %s39
      %s226 = sor.u32 %s224, %s225
      %p227 = scmp.eq.s32.totalorder %s226, 0
      %s229 = sadd.s32 %s228, 1
      %s230 = scalar_select %p227, %s228, %s229
      %p233 = pneg %p227
      %p234 = scmp.eq.s32.totalorder %s24, 1
      %p235 = por %p233, %p234
      %p236 = scmp.ne.s32.totalorder %s228, %s231
      %p237 = scmp.eq.s32.totalorder %s24, 0
      %p238 = por %p236, %p237
      %p239 = scmp.ne.s32.totalorder %s228, %s231
      %p240 = scmp.eq.s32.totalorder %s29, 1
      %p241 = por %p239, %p240
      %p242 = scmp.ne.s32.totalorder %s231, %s232
      %p243 = scmp.eq.s32.totalorder %s29, 0
      %p244 = por %p242, %p243
      %p245 = scmp.ne.s32.totalorder %s231, %s232
      %p246 = scmp.eq.s32.totalorder %s30, 1
      %p247 = por %p245, %p246
      %p249 = scmp.ne.s32.totalorder %s232, %s248
      %p250 = scmp.eq.s32.totalorder %s30, 0
      %p251 = por %p249, %p250
      %p252 = scmp.le.s32.totalorder 1, %s24
      %p253 = scmp.lt.s32.totalorder %s24, 3
      %p254 = pnand %p252, %p253
      %p255 = pneg %p254
      // Predicated region
      $region9: #{tpu_custom_call.1} parent=5 // pred_check
        _
      $region10: #{tpu_custom_call.1} parent=5 // pred_check_branch
        %257 = sbr.rel (%p254) target = $region12
      $region11: #{tpu_custom_call.1} parent=5 // pred_region
        %s258 = ssub.s32 %s24, 1
        // Predicated region
        $region13: #{tpu_custom_call.1} parent=11 // pred_check
          %p259 = pneg %p111
        $region14: #{tpu_custom_call.1} parent=11 // pred_check_branch
          %261 = sbr.rel (%p259) target = $region16
        $region15: #{tpu_custom_call.1} parent=11 // pred_region
          _
        $region16: #{tpu_custom_call.1} parent=11 // pred_fallthru
          _
        // Predicated region
        $region17: #{tpu_custom_call.1} parent=11 // pred_check
          %p262 = pneg %p132
        $region18: #{tpu_custom_call.1} parent=11 // pred_check_branch
          %264 = sbr.rel (%p262) target = $region20
        $region19: #{tpu_custom_call.1} parent=11 // pred_region
          %s266 = ssub.s32 256, 256
          %267 = vsyncadd [#allocation6], %s266
          %s268 = sshll.u32 [#allocation7], 4
          %s269 = int_to_ptr.vmem [resolvable:$true] %s268
          %274 = dma.hbm_to_vmem [thread:$0]  %s3, 256, %s269, [#allocation6], 64, 64, 4
        $region20: #{tpu_custom_call.1} parent=11 // pred_fallthru
          _
        // Predicated region
        $region21: #{tpu_custom_call.1} parent=11 // pred_check
          %p275 = pneg %p153
        $region22: #{tpu_custom_call.1} parent=11 // pred_check_branch
          %277 = sbr.rel (%p275) target = $region24
        $region23: #{tpu_custom_call.1} parent=11 // pred_region
          _
        $region24: #{tpu_custom_call.1} parent=11 // pred_fallthru
          _
        // Predicated region
        $region25: #{tpu_custom_call.1} parent=11 // pred_check
          %p278 = pneg %p174
        $region26: #{tpu_custom_call.1} parent=11 // pred_check_branch
          %280 = sbr.rel (%p278) target = $region28
        $region27: #{tpu_custom_call.1} parent=11 // pred_region
          _
        $region28: #{tpu_custom_call.1} parent=11 // pred_fallthru
          _
        // Predicated region
        $region29: #{tpu_custom_call.1} parent=11 // pred_check
          %p281 = pneg %p195
        $region30: #{tpu_custom_call.1} parent=11 // pred_check_branch
          %283 = sbr.rel (%p281) target = $region32
        $region31: #{tpu_custom_call.1} parent=11 // pred_region
          %s285 = ssub.s32 512, 512
          %286 = vsyncadd [#allocation9], %s285
          %s287 = sshll.u32 [#allocation8], 4
          %s288 = int_to_ptr.vmem [resolvable:$true] %s287
          %293 = dma.hbm_to_vmem [thread:$0]  %s6, 512, %s288, [#allocation9], 64, 64, 4
        $region32: #{tpu_custom_call.1} parent=11 // pred_fallthru
          _
        // Predicated region
        $region33: #{tpu_custom_call.1} parent=11 // pred_check
          %p294 = pneg %p216
        $region34: #{tpu_custom_call.1} parent=11 // pred_check_branch
          %296 = sbr.rel (%p294) target = $region36
        $region35: #{tpu_custom_call.1} parent=11 // pred_region
          _
        $region36: #{tpu_custom_call.1} parent=11 // pred_fallthru
          _
      $region12: #{tpu_custom_call.1} parent=5 // pred_fallthru
        _
      %p297 = scmp.lt.s32.totalorder %s24, 2
      // Predicated region
      $region37: #{tpu_custom_call.1} parent=5 // pred_check
        %p298 = pneg %p297
      $region38: #{tpu_custom_call.1} parent=5 // pred_check_branch
        %300 = sbr.rel (%p298) target = $region40
      $region39: #{tpu_custom_call.1} parent=5 // pred_region
        // Predicated region
        $region41: #{tpu_custom_call.1} parent=39 // pred_check
          %p301 = pneg %p58
        $region42: #{tpu_custom_call.1} parent=39 // pred_check_branch
          %303 = sbr.rel (%p301) target = $region44
        $region43: #{tpu_custom_call.1} parent=39 // pred_region
          %s304 = sand.u32 %s48, 1
          %s305 = scalar_lea.sflag [#allocation3], %s304
          %s306 = sand.u32 %s48, 1
          %s307 = smul.addr %s306, 8
          %s308 = scalar_lea.vmem [#allocation2], %s307
          %s310 = ssub.s32 128, 128
          %311 = vsyncadd %s305, %s310
          %s312 = sadd.s32 %s32, %s31
          %s313 = smul.addr %s312, 128
          %s314 = scalar_lea.hbm %s0, %s313
          %s316 = sshll.u32 %s308, 4
          %s317 = int_to_ptr.vmem [resolvable:$true] %s316
          %319 = dma.hbm_to_vmem [thread:$0]  %s314, 128, %s317, %s305
        $region44: #{tpu_custom_call.1} parent=39 // pred_fallthru
          _
        // Predicated region
        $region45: #{tpu_custom_call.1} parent=39 // pred_check
          %p320 = pneg %p84
        $region46: #{tpu_custom_call.1} parent=39 // pred_check_branch
          %322 = sbr.rel (%p320) target = $region48
        $region47: #{tpu_custom_call.1} parent=39 // pred_region
          %s323 = sand.u32 %s24, 1
          %s324 = scalar_lea.sflag [#allocation6], %s323
          %s325 = sand.u32 %s74, 1
          %s326 = smul.addr %s325, 8
          %s327 = scalar_lea.vmem [#allocation5], %s326
          %s329 = ssub.s32 128, 128
          %330 = vsyncadd %s324, %s329
          %s331 = smul.addr %s31, 128
          %s332 = scalar_lea.hbm %s1, %s331
          %s334 = sshll.u32 %s327, 4
          %s335 = int_to_ptr.vmem [resolvable:$true] %s334
          %337 = dma.hbm_to_vmem [thread:$0]  %s332, 128, %s335, %s324
        $region48: #{tpu_custom_call.1} parent=39 // pred_fallthru
          _
      $region40: #{tpu_custom_call.1} parent=5 // pred_fallthru
        _
      %p338 = scmp.le.s32.totalorder 1, %s24
      %p339 = scmp.lt.s32.totalorder %s24, 3
      %p340 = pnand %p338, %p339
      %p341 = pneg %p340
      // Predicated region
      $region49: #{tpu_custom_call.1} parent=5 // pred_check
        _
      $region50: #{tpu_custom_call.1} parent=5 // pred_check_branch
        %343 = sbr.rel (%p340) target = $region52
      $region51: #{tpu_custom_call.1} parent=5 // pred_region
        %s344 = ssub.s32 %s24, 1
        %s345 = sand.u32 %s51, 1
        %s346 = scalar_lea.sflag [#allocation3], %s345
        %s347 = sand.u32 %s51, 1
        %s348 = smul.addr %s347, 8
        %s349 = scalar_lea.vmem [#allocation2], %s348
        // Predicated region
        $region53: #{tpu_custom_call.1} parent=51 // pred_check
          %p350 = pneg %p64
        $region54: #{tpu_custom_call.1} parent=51 // pred_check_branch
          %352 = sbr.rel (%p350) target = $region56
        $region55: #{tpu_custom_call.1} parent=51 // pred_region
          %353 = dma.done %s346, 128
        $region56: #{tpu_custom_call.1} parent=51 // pred_fallthru
          _
        %s354 = sand.u32 %s29, 1
        %s355 = scalar_lea.sflag [#allocation6], %s354
        %s356 = sand.u32 %s77, 1
        %s357 = smul.addr %s356, 8
        %s358 = scalar_lea.vmem [#allocation5], %s357
        // Predicated region
        $region57: #{tpu_custom_call.1} parent=51 // pred_check
          %p359 = pneg %p90
        $region58: #{tpu_custom_call.1} parent=51 // pred_check_branch
          %361 = sbr.rel (%p359) target = $region60
        $region59: #{tpu_custom_call.1} parent=51 // pred_region
          %362 = dma.done %s355, 128
        $region60: #{tpu_custom_call.1} parent=51 // pred_fallthru
          _
        // Predicated region
        $region61: #{tpu_custom_call.1} parent=51 // pred_check
          %p363 = pneg %p132
        $region62: #{tpu_custom_call.1} parent=51 // pred_check_branch
          %365 = sbr.rel (%p363) target = $region64
        $region63: #{tpu_custom_call.1} parent=51 // pred_region
          %366 = dma.done [#allocation6], 256
        $region64: #{tpu_custom_call.1} parent=51 // pred_fallthru
          _
        // Predicated region
        $region65: #{tpu_custom_call.1} parent=51 // pred_check
          %p367 = pneg %p195
        $region66: #{tpu_custom_call.1} parent=51 // pred_check_branch
          %369 = sbr.rel (%p367) target = $region68
        $region67: #{tpu_custom_call.1} parent=51 // pred_region
          %370 = dma.done [#allocation9], 512
        $region68: #{tpu_custom_call.1} parent=51 // pred_fallthru
          _
        %s371 = sand.u32 %s51, 1
        %s372 = scalar_lea.sflag [#allocation3], %s371
        %s373 = sand.u32 %s51, 1
        %s374 = smul.addr %s373, 8
        %s375 = scalar_lea.vmem [#allocation2], %s374
        %p376 = pneg %p64
        %p377 = pneg %p61
        %s378 = sand.u32 %s29, 1
        %s379 = scalar_lea.sflag [#allocation6], %s378
        %s380 = sand.u32 %s77, 1
        %s381 = smul.addr %s380, 8
        %s382 = scalar_lea.vmem [#allocation5], %s381
        %p383 = pneg %p90
        %p384 = pneg %p87
        %p385 = pneg %p111
        %p386 = pneg %p108
        %p387 = pneg %p132
        %p388 = pneg %p129
        %p389 = pneg %p153
        %p390 = pneg %p150
        %p391 = pneg %p174
        %p392 = pneg %p171
        %p393 = pneg %p195
        %p394 = pneg %p192
        %p395 = pneg %p216
        %p396 = pneg %p213
        %p397 = pneg %p244
        %p398 = pneg %p241
        %s399 = sand.u32 %s231, 1
        %s400 = scalar_lea.sflag [#allocation4], %s399
        %s401 = sand.u32 %s231, 1
        %s402 = smul.addr %s401, 8
        %s403 = scalar_lea.vmem [#allocation10], %s402
        %v405 = vld [vmem:[%s349] sm:$0xff]
        %v406 = vld [vmem:[%s2] sm:$0x1]
        %vm407 = vcmask 261120
        %v408 = vsel %vm407, %v405, 0.0
        %409 = vadd.xlane.f32.xlu0 %v408
        %v410 = vpop.xlane.xlu0 %409
        %v411 = vrcp.pop 32.0
        %v412 = vmul.f32 %v410, %v411
        %v413 = vsub.f32 %v405, %v412
        %v414 = vmul.f32 %v413, %v413
        %v415 = vsel %vm407, %v414, 0.0
        %416 = vadd.xlane.f32.xlu0 %v415
        %v417 = vpop.xlane.xlu0 %416
        %v418 = vmul.f32 %v417, %v411
        %v419 = vadd.f32 %v418, 1e-05
        %v420 = vrsqrt.pop %v419
        %v421 = vmul.f32 %v413, %v420
        %v423 = vlaneseq
        %v424 = vshrl.u32 %v423, 7
        %v425 = vsub.s32 0, %v424
        %v426 = vrot.slane %v406, %v425
        %v428 = vmul.f32 %v421, %v426
        %v429 = vld [vmem:[%s358] sm:$0xff]
        %v430 = vpack.c.bf16 %v429, %v429
        %v431 = vpack.c.bf16 %v428, %v428
        %v432 = vld [vmem:[#allocation7] sm:$0xf]
        %v433 = vld [vmem:[#allocation7 + $0x4] sm:$0xf]
        %v434 = vld [vmem:[#allocation7 + $0x8] sm:$0xf]
        %v435 = vld [vmem:[#allocation7 + $0xc] sm:$0xf]
        %v440 = vunpack.c.l.b16 %v432
        %v441 = vunpack.c.l.b16 %v433
        %v442 = vunpack.c.l.b16 %v434
        %v443 = vunpack.c.l.b16 %v435
        %v444 = vpack.c.b16 %v441, %v440
        %v445 = vpack.c.b16 %v443, %v442
        %v449 = vsel %vm407, %v431, 0
        %451 = vmatprep.subr.bf16.mxu0 0
        %452 = vmatpush1.bf16.msra.mxu0 %v444
        %453 = vmatprep.subr.bf16.mxu0 0
        %454 = vmatpush1.bf16.msra.mxu0 %v445
        %455 = vmatprep.subr.bf16.mxu0 0
        %456 = vmatpush1.bf16.msra.mxu0 0
        %457 = vmatprep.subr.bf16.mxu0 0
        %458 = vmatpush1.bf16.msra.mxu0 0
        %459 = vmatprep.subr.bf16.mxu0 0
        %460 = vmatpush1.bf16.msra.mxu0 0
        %461 = vmatprep.subr.bf16.mxu0 0
        %462 = vmatpush1.bf16.msra.mxu0 0
        %463 = vmatprep.subr.bf16.mxu0 0
        %464 = vmatpush1.bf16.msra.mxu0 0
        %465 = vmatprep.subr.bf16.mxu0 0
        %466 = vmatpush1.bf16.msra.mxu0 0
        %467 = vmatprep.subr.bf16.mxu0 0
        %468 = vmatpush1.bf16.msra.mxu0 0
        %469 = vmatprep.subr.bf16.mxu0 0
        %470 = vmatpush1.bf16.msra.mxu0 0
        %471 = vmatprep.subr.bf16.mxu0 0
        %472 = vmatpush1.bf16.msra.mxu0 0
        %473 = vmatprep.subr.bf16.mxu0 0
        %474 = vmatpush1.bf16.msra.mxu0 0
        %475 = vmatprep.subr.bf16.mxu0 0
        %476 = vmatpush1.bf16.msra.mxu0 0
        %477 = vmatprep.subr.bf16.mxu0 0
        %478 = vmatpush1.bf16.msra.mxu0 0
        %479 = vmatprep.subr.bf16.mxu0 0
        %480 = vmatpush1.bf16.msra.mxu0 0
        %481 = vmatprep.subr.bf16.mxu0 0
        %482 = vmatpush1.bf16.msra.mxu0 0
        %483 = vmatprep.mubr.bf16.mxu0 0
        %484 = vmatmul.mubr.bf16.gmra.mrb[0].mxu0 %v449
        %v485 = vpop.f32.mrb[0].mxu0
        %v486 = vadd.f32 0.0, %v485
        %v487 = vpop.f32.mrb[0].mxu0
        %v488 = vpop.f32.mrb[0].mxu0
        %v489 = vpop.f32.mrb[0].mxu0
        %490 = vdwg.mxu0
        %v491 = vld [vmem:[%s4] sm:$0xf]
        %v492 = vld [vmem:[%s4 + $0x4] sm:$0xf]
        %v493 = vld [vmem:[%s4 + $0x8] sm:$0xf]
        %v494 = vld [vmem:[%s4 + $0xc] sm:$0xf]
        %v499 = vunpack.c.l.b16 %v491
        %v500 = vunpack.c.l.b16 %v492
        %v501 = vunpack.c.l.b16 %v493
        %v502 = vunpack.c.l.b16 %v494
        %v503 = vpack.c.b16 %v500, %v499
        %v504 = vpack.c.b16 %v502, %v501
        %v508 = vsel %vm407, %v430, 0
        %510 = vmatprep.subr.bf16.mxu0 0
        %511 = vmatpush1.bf16.msra.mxu0 %v503
        %512 = vmatprep.subr.bf16.mxu0 0
        %513 = vmatpush1.bf16.msra.mxu0 %v504
        %514 = vmatprep.subr.bf16.mxu0 0
        %515 = vmatpush1.bf16.msra.mxu0 0
        %516 = vmatprep.subr.bf16.mxu0 0
        %517 = vmatpush1.bf16.msra.mxu0 0
        %518 = vmatprep.subr.bf16.mxu0 0
        %519 = vmatpush1.bf16.msra.mxu0 0
        %520 = vmatprep.subr.bf16.mxu0 0
        %521 = vmatpush1.bf16.msra.mxu0 0
        %522 = vmatprep.subr.bf16.mxu0 0
        %523 = vmatpush1.bf16.msra.mxu0 0
        %524 = vmatprep.subr.bf16.mxu0 0
        %525 = vmatpush1.bf16.msra.mxu0 0
        %526 = vmatprep.subr.bf16.mxu0 0
        %527 = vmatpush1.bf16.msra.mxu0 0
        %528 = vmatprep.subr.bf16.mxu0 0
        %529 = vmatpush1.bf16.msra.mxu0 0
        %530 = vmatprep.subr.bf16.mxu0 0
        %531 = vmatpush1.bf16.msra.mxu0 0
        %532 = vmatprep.subr.bf16.mxu0 0
        %533 = vmatpush1.bf16.msra.mxu0 0
        %534 = vmatprep.subr.bf16.mxu0 0
        %535 = vmatpush1.bf16.msra.mxu0 0
        %536 = vmatprep.subr.bf16.mxu0 0
        %537 = vmatpush1.bf16.msra.mxu0 0
        %538 = vmatprep.subr.bf16.mxu0 0
        %539 = vmatpush1.bf16.msra.mxu0 0
        %540 = vmatprep.subr.bf16.mxu0 0
        %541 = vmatpush1.bf16.msra.mxu0 0
        %542 = vmatprep.mubr.bf16.mxu0 0
        %543 = vmatmul.mubr.bf16.gmra.mrb[0].mxu0 %v508
        %v544 = vpop.f32.mrb[0].mxu0
        %v545 = vadd.f32 0.0, %v544
        %v546 = vpop.f32.mrb[0].mxu0
        %v547 = vpop.f32.mrb[0].mxu0
        %v548 = vpop.f32.mrb[0].mxu0
        %549 = vdwg.mxu0
        %v550 = vpack.c.bf16 %v486, %v486
        %v551 = vpack.c.bf16 %v545, %v545
        %553 = vrot.lane.b32.xlu0 %v550, 112
        %v554 = vpop.permute.xlu0 %553
        %555 = vrot.lane.b32.xlu0 %v550, 96
        %v556 = vpop.permute.xlu0 %555
        %557 = vrot.lane.b32.xlu0 %v550, 80
        %v558 = vpop.permute.xlu0 %557
        %560 = vrot.lane.b32.xlu0 %v551, 112
        %v561 = vpop.permute.xlu0 %560
        %563 = vrot.lane.b32.xlu0 %v551, 96
        %v564 = vpop.permute.xlu0 %563
        %566 = vrot.lane.b32.xlu0 %v551, 80
        %v567 = vpop.permute.xlu0 %566
        %v569 = vld [vmem:[%s5] sm:$0x1]
        %v570 = vld [vmem:[%s5 + $0x1] sm:$0x1]
        %v571 = vlaneseq
        %v572 = vshrl.u32 %v571, 7
        %vm573 = vcmp.eq.s32.totalorder %v572, 0
        %v574 = vsel %vm573, 1, 0
        %vm575 = vcmp.eq.s32.totalorder %v574, 1
        %v577 = vpack.i.b16 %v569, %v569
        %v579 = vlaneseq
        %v580 = vshrl.u32 %v579, 7
        %v581 = vsub.s32 0, %v580
        %v582 = vrot.slane %v577, %v581
        %vm583 = vmpackc.low %vm575, %vm575
        %v584 = vsel %vm583, %v582, %v551
        %v585 = vsel %vm583, %v582, %v561
        %v586 = vsel %vm583, %v582, %v564
        %v587 = vsel %vm583, %v582, %v567
        %v589 = vpack.i.b16 %v570, %v570
        %v591 = vlaneseq
        %v592 = vshrl.u32 %v591, 7
        %v593 = vsub.s32 0, %v592
        %v594 = vrot.slane %v589, %v593
        %595 = vrot.lane.b32.xlu0 %v551, 64
        %v596 = vpop.permute.xlu0 %595
        %597 = vrot.lane.b32.xlu0 %v561, 64
        %v598 = vpop.permute.xlu0 %597
        %599 = vrot.lane.b32.xlu0 %v564, 64
        %v600 = vpop.permute.xlu0 %599
        %601 = vrot.lane.b32.xlu0 %v567, 64
        %v602 = vpop.permute.xlu0 %601
        %v607 = vsel %vm583, %v594, %v596
        %v608 = vsel %vm583, %v594, %v598
        %v609 = vsel %vm583, %v594, %v600
        %v610 = vsel %vm583, %v594, %v602
        %vm611 = vcmask 130048
        %v613 = vsel %vm611, %v550, 0
        %v616 = vsel %vm611, %v584, 0
        %618 = vmatprep.subr.bf16.mxu0 0
        %619 = vmatpush1.bf16.xpose.msra.mxu0 %v616
        %620 = vmatprep.subr.bf16.mxu0 0
        %621 = vmatpush1.bf16.xpose.msra.mxu0 0
        %622 = vmatprep.subr.bf16.mxu0 0
        %623 = vmatpush1.bf16.xpose.msra.mxu0 0
        %624 = vmatprep.subr.bf16.mxu0 0
        %625 = vmatpush1.bf16.xpose.msra.mxu0 0
        %626 = vmatprep.subr.bf16.mxu0 0
        %627 = vmatpush1.bf16.xpose.msra.mxu0 0
        %628 = vmatprep.subr.bf16.mxu0 0
        %629 = vmatpush1.bf16.xpose.msra.mxu0 0
        %630 = vmatprep.subr.bf16.mxu0 0
        %631 = vmatpush1.bf16.xpose.msra.mxu0 0
        %632 = vmatprep.subr.bf16.mxu0 0
        %633 = vmatpush1.bf16.xpose.msra.mxu0 0
        %634 = vmatprep.subr.bf16.mxu0 0
        %635 = vmatpush1.bf16.xpose.msra.mxu0 0
        %636 = vmatprep.subr.bf16.mxu0 0
        %637 = vmatpush1.bf16.xpose.msra.mxu0 0
        %638 = vmatprep.subr.bf16.mxu0 0
        %639 = vmatpush1.bf16.xpose.msra.mxu0 0
        %640 = vmatprep.subr.bf16.mxu0 0
        %641 = vmatpush1.bf16.xpose.msra.mxu0 0
        %642 = vmatprep.subr.bf16.mxu0 0
        %643 = vmatpush1.bf16.xpose.msra.mxu0 0
        %644 = vmatprep.subr.bf16.mxu0 0
        %645 = vmatpush1.bf16.xpose.msra.mxu0 0
        %646 = vmatprep.subr.bf16.mxu0 0
        %647 = vmatpush1.bf16.xpose.msra.mxu0 0
        %648 = vmatprep.subr.bf16.mxu0 0
        %649 = vmatpush1.bf16.xpose.msra.mxu0 0
        %650 = vmatprep.mubr.bf16.mxu0 0
        %651 = vmatmul.mubr.bf16.gmra.mrb[0].mxu0 %v613
        %v652 = vpop.f32.mrb[0].mxu0
        %v653 = vadd.f32 0.0, %v652
        %v654 = vpop.f32.mrb[0].mxu0
        %v655 = vpop.f32.mrb[0].mxu0
        %v656 = vpop.f32.mrb[0].mxu0
        %657 = vdwg.mxu0
        %v659 = vsel %vm611, %v554, 0
        %v662 = vsel %vm611, %v585, 0
        %664 = vmatprep.subr.bf16.mxu0 0
        %665 = vmatpush1.bf16.xpose.msra.mxu0 %v662
        %666 = vmatprep.subr.bf16.mxu0 0
        %667 = vmatpush1.bf16.xpose.msra.mxu0 0
        %668 = vmatprep.subr.bf16.mxu0 0
        %669 = vmatpush1.bf16.xpose.msra.mxu0 0
        %670 = vmatprep.subr.bf16.mxu0 0
        %671 = vmatpush1.bf16.xpose.msra.mxu0 0
        %672 = vmatprep.subr.bf16.mxu0 0
        %673 = vmatpush1.bf16.xpose.msra.mxu0 0
        %674 = vmatprep.subr.bf16.mxu0 0
        %675 = vmatpush1.bf16.xpose.msra.mxu0 0
        %676 = vmatprep.subr.bf16.mxu0 0
        %677 = vmatpush1.bf16.xpose.msra.mxu0 0
        %678 = vmatprep.subr.bf16.mxu0 0
        %679 = vmatpush1.bf16.xpose.msra.mxu0 0
        %680 = vmatprep.subr.bf16.mxu0 0
        %681 = vmatpush1.bf16.xpose.msra.mxu0 0
        %682 = vmatprep.subr.bf16.mxu0 0
        %683 = vmatpush1.bf16.xpose.msra.mxu0 0
        %684 = vmatprep.subr.bf16.mxu0 0
        %685 = vmatpush1.bf16.xpose.msra.mxu0 0
        %686 = vmatprep.subr.bf16.mxu0 0
        %687 = vmatpush1.bf16.xpose.msra.mxu0 0
        %688 = vmatprep.subr.bf16.mxu0 0
        %689 = vmatpush1.bf16.xpose.msra.mxu0 0
        %690 = vmatprep.subr.bf16.mxu0 0
        %691 = vmatpush1.bf16.xpose.msra.mxu0 0
        %692 = vmatprep.subr.bf16.mxu0 0
        %693 = vmatpush1.bf16.xpose.msra.mxu0 0
        %694 = vmatprep.subr.bf16.mxu0 0
        %695 = vmatpush1.bf16.xpose.msra.mxu0 0
        %696 = vmatprep.mubr.bf16.mxu0 0
        %697 = vmatmul.mubr.bf16.gmra.mrb[0].mxu0 %v659
        %v698 = vpop.f32.mrb[0].mxu0
        %v699 = vadd.f32 0.0, %v698
        %v700 = vpop.f32.mrb[0].mxu0
        %v701 = vpop.f32.mrb[0].mxu0
        %v702 = vpop.f32.mrb[0].mxu0
        %703 = vdwg.mxu0
        %v705 = vsel %vm611, %v556, 0
        %v708 = vsel %vm611, %v586, 0
        %710 = vmatprep.subr.bf16.mxu0 0
        %711 = vmatpush1.bf16.xpose.msra.mxu0 %v708
        %712 = vmatprep.subr.bf16.mxu0 0
        %713 = vmatpush1.bf16.xpose.msra.mxu0 0
        %714 = vmatprep.subr.bf16.mxu0 0
        %715 = vmatpush1.bf16.xpose.msra.mxu0 0
        %716 = vmatprep.subr.bf16.mxu0 0
        %717 = vmatpush1.bf16.xpose.msra.mxu0 0
        %718 = vmatprep.subr.bf16.mxu0 0
        %719 = vmatpush1.bf16.xpose.msra.mxu0 0
        %720 = vmatprep.subr.bf16.mxu0 0
        %721 = vmatpush1.bf16.xpose.msra.mxu0 0
        %722 = vmatprep.subr.bf16.mxu0 0
        %723 = vmatpush1.bf16.xpose.msra.mxu0 0
        %724 = vmatprep.subr.bf16.mxu0 0
        %725 = vmatpush1.bf16.xpose.msra.mxu0 0
        %726 = vmatprep.subr.bf16.mxu0 0
        %727 = vmatpush1.bf16.xpose.msra.mxu0 0
        %728 = vmatprep.subr.bf16.mxu0 0
        %729 = vmatpush1.bf16.xpose.msra.mxu0 0
        %730 = vmatprep.subr.bf16.mxu0 0
        %731 = vmatpush1.bf16.xpose.msra.mxu0 0
        %732 = vmatprep.subr.bf16.mxu0 0
        %733 = vmatpush1.bf16.xpose.msra.mxu0 0
        %734 = vmatprep.subr.bf16.mxu0 0
        %735 = vmatpush1.bf16.xpose.msra.mxu0 0
        %736 = vmatprep.subr.bf16.mxu0 0
        %737 = vmatpush1.bf16.xpose.msra.mxu0 0
        %738 = vmatprep.subr.bf16.mxu0 0
        %739 = vmatpush1.bf16.xpose.msra.mxu0 0
        %740 = vmatprep.subr.bf16.mxu0 0
        %741 = vmatpush1.bf16.xpose.msra.mxu0 0
        %742 = vmatprep.mubr.bf16.mxu0 0
        %743 = vmatmul.mubr.bf16.gmra.mrb[0].mxu0 %v705
        %v744 = vpop.f32.mrb[0].mxu0
        %v745 = vadd.f32 0.0, %v744
        %v746 = vpop.f32.mrb[0].mxu0
        %v747 = vpop.f32.mrb[0].mxu0
        %v748 = vpop.f32.mrb[0].mxu0
        %749 = vdwg.mxu0
        %v751 = vsel %vm611, %v558, 0
        %v754 = vsel %vm611, %v587, 0
        %756 = vmatprep.subr.bf16.mxu0 0
        %757 = vmatpush1.bf16.xpose.msra.mxu0 %v754
        %758 = vmatprep.subr.bf16.mxu0 0
        %759 = vmatpush1.bf16.xpose.msra.mxu0 0
        %760 = vmatprep.subr.bf16.mxu0 0
        %761 = vmatpush1.bf16.xpose.msra.mxu0 0
        %762 = vmatprep.subr.bf16.mxu0 0
        %763 = vmatpush1.bf16.xpose.msra.mxu0 0
        %764 = vmatprep.subr.bf16.mxu0 0
        %765 = vmatpush1.bf16.xpose.msra.mxu0 0
        %766 = vmatprep.subr.bf16.mxu0 0
        %767 = vmatpush1.bf16.xpose.msra.mxu0 0
        %768 = vmatprep.subr.bf16.mxu0 0
        %769 = vmatpush1.bf16.xpose.msra.mxu0 0
        %770 = vmatprep.subr.bf16.mxu0 0
        %771 = vmatpush1.bf16.xpose.msra.mxu0 0
        %772 = vmatprep.subr.bf16.mxu0 0
        %773 = vmatpush1.bf16.xpose.msra.mxu0 0
        %774 = vmatprep.subr.bf16.mxu0 0
        %775 = vmatpush1.bf16.xpose.msra.mxu0 0
        %776 = vmatprep.subr.bf16.mxu0 0
        %777 = vmatpush1.bf16.xpose.msra.mxu0 0
        %778 = vmatprep.subr.bf16.mxu0 0
        %779 = vmatpush1.bf16.xpose.msra.mxu0 0
        %780 = vmatprep.subr.bf16.mxu0 0
        %781 = vmatpush1.bf16.xpose.msra.mxu0 0
        %782 = vmatprep.subr.bf16.mxu0 0
        %783 = vmatpush1.bf16.xpose.msra.mxu0 0
        %784 = vmatprep.subr.bf16.mxu0 0
        %785 = vmatpush1.bf16.xpose.msra.mxu0 0
        %786 = vmatprep.subr.bf16.mxu0 0
        %787 = vmatpush1.bf16.xpose.msra.mxu0 0
        %788 = vmatprep.mubr.bf16.mxu0 0
        %789 = vmatmul.mubr.bf16.gmra.mrb[0].mxu0 %v751
        %v790 = vpop.f32.mrb[0].mxu0
        %v791 = vadd.f32 0.0, %v790
        %v792 = vpop.f32.mrb[0].mxu0
        %v793 = vpop.f32.mrb[0].mxu0
        %v794 = vpop.f32.mrb[0].mxu0
        %795 = vdwg.mxu0
        %v796 = vlaneseq
        %v797 = vand.u32 %v796, 127
        %vm798 = vcmp.lt.s32.totalorder %v797, 7
        %v799 = vsel %vm798, 1, 0
        %vm800 = vcmp.eq.s32.totalorder %v799, 1
        %v801 = vsel %vm800, %v653, -1e+30
        %v802 = vsel %vm800, %v699, -1e+30
        %v803 = vsel %vm800, %v745, -1e+30
        %v804 = vsel %vm800, %v791, -1e+30
        %vm805 = vcmask 64512
        %v806 = vsel %vm805, %v801, -inf
        %807 = vmax.xlane.f32.xlu0 %v806
        %v808 = vpop.xlane.xlu0 %807
        %v809 = vsel %vm805, %v802, -inf
        %810 = vmax.xlane.f32.xlu0 %v809
        %v811 = vpop.xlane.xlu0 %810
        %v812 = vsel %vm805, %v803, -inf
        %813 = vmax.xlane.f32.xlu0 %v812
        %v814 = vpop.xlane.xlu0 %813
        %v815 = vsel %vm805, %v804, -inf
        %816 = vmax.xlane.f32.xlu0 %v815
        %v817 = vpop.xlane.xlu0 %816
        %v818 = vsub.f32 %v801, %v808
        %v819 = vsub.f32 %v802, %v811
        %v820 = vsub.f32 %v803, %v814
        %v821 = vsub.f32 %v804, %v817
        %v822 = vmul.f32 %v818, 1.442695
        %v823 = vpow.pop %v822
        %v824 = vmul.f32 %v819, 1.442695
        %v825 = vpow.pop %v824
        %v826 = vmul.f32 %v820, 1.442695
        %v827 = vpow.pop %v826
        %v828 = vmul.f32 %v821, 1.442695
        %v829 = vpow.pop %v828
        %v830 = vsel %vm805, %v823, 0.0
        %831 = vadd.xlane.f32.xlu0 %v830
        %v832 = vpop.xlane.xlu0 %831
        %v833 = vsel %vm805, %v825, 0.0
        %834 = vadd.xlane.f32.xlu0 %v833
        %v835 = vpop.xlane.xlu0 %834
        %v836 = vsel %vm805, %v827, 0.0
        %837 = vadd.xlane.f32.xlu0 %v836
        %v838 = vpop.xlane.xlu0 %837
        %v839 = vsel %vm805, %v829, 0.0
        %840 = vadd.xlane.f32.xlu0 %v839
        %v841 = vpop.xlane.xlu0 %840
        %v842 = vrcp.pop %v832
        %v843 = vrcp.pop %v835
        %v844 = vrcp.pop %v838
        %v845 = vrcp.pop %v841
        %v846 = vmul.f32 %v823, %v842
        %v847 = vmul.f32 %v825, %v843
        %v848 = vmul.f32 %v827, %v844
        %v849 = vmul.f32 %v829, %v845
        %v850 = vpack.c.bf16 %v846, %v846
        %v851 = vpack.c.bf16 %v847, %v847
        %v852 = vpack.c.bf16 %v848, %v848
        %v853 = vpack.c.bf16 %v849, %v849
        %v855 = vsel %vm805, %v850, 0
        %vm857 = vcmask 1043456
        %v859 = vsel %vm857, %v607, 0
        %861 = vmatprep.subr.bf16.mxu0 0
        %862 = vmatpush1.bf16.msra.mxu0 %v859
        %863 = vmatprep.subr.bf16.mxu0 0
        %864 = vmatpush1.bf16.msra.mxu0 0
        %865 = vmatprep.subr.bf16.mxu0 0
        %866 = vmatpush1.bf16.msra.mxu0 0
        %867 = vmatprep.subr.bf16.mxu0 0
        %868 = vmatpush1.bf16.msra.mxu0 0
        %869 = vmatprep.subr.bf16.mxu0 0
        %870 = vmatpush1.bf16.msra.mxu0 0
        %871 = vmatprep.subr.bf16.mxu0 0
        %872 = vmatpush1.bf16.msra.mxu0 0
        %873 = vmatprep.subr.bf16.mxu0 0
        %874 = vmatpush1.bf16.msra.mxu0 0
        %875 = vmatprep.subr.bf16.mxu0 0
        %876 = vmatpush1.bf16.msra.mxu0 0
        %877 = vmatprep.subr.bf16.mxu0 0
        %878 = vmatpush1.bf16.msra.mxu0 0
        %879 = vmatprep.subr.bf16.mxu0 0
        %880 = vmatpush1.bf16.msra.mxu0 0
        %881 = vmatprep.subr.bf16.mxu0 0
        %882 = vmatpush1.bf16.msra.mxu0 0
        %883 = vmatprep.subr.bf16.mxu0 0
        %884 = vmatpush1.bf16.msra.mxu0 0
        %885 = vmatprep.subr.bf16.mxu0 0
        %886 = vmatpush1.bf16.msra.mxu0 0
        %887 = vmatprep.subr.bf16.mxu0 0
        %888 = vmatpush1.bf16.msra.mxu0 0
        %889 = vmatprep.subr.bf16.mxu0 0
        %890 = vmatpush1.bf16.msra.mxu0 0
        %891 = vmatprep.subr.bf16.mxu0 0
        %892 = vmatpush1.bf16.msra.mxu0 0
        %893 = vmatprep.mubr.bf16.mxu0 0
        %894 = vmatmul.mubr.bf16.gmra.mrb[0].mxu0 %v855
        %v895 = vpop.f32.mrb[0].mxu0
        %v896 = vadd.f32 0.0, %v895
        %v897 = vpop.f32.mrb[0].mxu0
        %v898 = vpop.f32.mrb[0].mxu0
        %v899 = vpop.f32.mrb[0].mxu0
        %900 = vdwg.mxu0
        %v902 = vsel %vm805, %v851, 0
        %v905 = vsel %vm857, %v608, 0
        %907 = vmatprep.subr.bf16.mxu0 0
        %908 = vmatpush1.bf16.msra.mxu0 %v905
        %909 = vmatprep.subr.bf16.mxu0 0
        %910 = vmatpush1.bf16.msra.mxu0 0
        %911 = vmatprep.subr.bf16.mxu0 0
        %912 = vmatpush1.bf16.msra.mxu0 0
        %913 = vmatprep.subr.bf16.mxu0 0
        %914 = vmatpush1.bf16.msra.mxu0 0
        %915 = vmatprep.subr.bf16.mxu0 0
        %916 = vmatpush1.bf16.msra.mxu0 0
        %917 = vmatprep.subr.bf16.mxu0 0
        %918 = vmatpush1.bf16.msra.mxu0 0
        %919 = vmatprep.subr.bf16.mxu0 0
        %920 = vmatpush1.bf16.msra.mxu0 0
        %921 = vmatprep.subr.bf16.mxu0 0
        %922 = vmatpush1.bf16.msra.mxu0 0
        %923 = vmatprep.subr.bf16.mxu0 0
        %924 = vmatpush1.bf16.msra.mxu0 0
        %925 = vmatprep.subr.bf16.mxu0 0
        %926 = vmatpush1.bf16.msra.mxu0 0
        %927 = vmatprep.subr.bf16.mxu0 0
        %928 = vmatpush1.bf16.msra.mxu0 0
        %929 = vmatprep.subr.bf16.mxu0 0
        %930 = vmatpush1.bf16.msra.mxu0 0
        %931 = vmatprep.subr.bf16.mxu0 0
        %932 = vmatpush1.bf16.msra.mxu0 0
        %933 = vmatprep.subr.bf16.mxu0 0
        %934 = vmatpush1.bf16.msra.mxu0 0
        %935 = vmatprep.subr.bf16.mxu0 0
        %936 = vmatpush1.bf16.msra.mxu0 0
        %937 = vmatprep.subr.bf16.mxu0 0
        %938 = vmatpush1.bf16.msra.mxu0 0
        %939 = vmatprep.mubr.bf16.mxu0 0
        %940 = vmatmul.mubr.bf16.gmra.mrb[0].mxu0 %v902
        %v941 = vpop.f32.mrb[0].mxu0
        %v942 = vadd.f32 0.0, %v941
        %v943 = vpop.f32.mrb[0].mxu0
        %v944 = vpop.f32.mrb[0].mxu0
        %v945 = vpop.f32.mrb[0].mxu0
        %946 = vdwg.mxu0
        %v948 = vsel %vm805, %v852, 0
        %v951 = vsel %vm857, %v609, 0
        %953 = vmatprep.subr.bf16.mxu0 0
        %954 = vmatpush1.bf16.msra.mxu0 %v951
        %955 = vmatprep.subr.bf16.mxu0 0
        %956 = vmatpush1.bf16.msra.mxu0 0
        %957 = vmatprep.subr.bf16.mxu0 0
        %958 = vmatpush1.bf16.msra.mxu0 0
        %959 = vmatprep.subr.bf16.mxu0 0
        %960 = vmatpush1.bf16.msra.mxu0 0
        %961 = vmatprep.subr.bf16.mxu0 0
        %962 = vmatpush1.bf16.msra.mxu0 0
        %963 = vmatprep.subr.bf16.mxu0 0
        %964 = vmatpush1.bf16.msra.mxu0 0
        %965 = vmatprep.subr.bf16.mxu0 0
        %966 = vmatpush1.bf16.msra.mxu0 0
        %967 = vmatprep.subr.bf16.mxu0 0
        %968 = vmatpush1.bf16.msra.mxu0 0
        %969 = vmatprep.subr.bf16.mxu0 0
        %970 = vmatpush1.bf16.msra.mxu0 0
        %971 = vmatprep.subr.bf16.mxu0 0
        %972 = vmatpush1.bf16.msra.mxu0 0
        %973 = vmatprep.subr.bf16.mxu0 0
        %974 = vmatpush1.bf16.msra.mxu0 0
        %975 = vmatprep.subr.bf16.mxu0 0
        %976 = vmatpush1.bf16.msra.mxu0 0
        %977 = vmatprep.subr.bf16.mxu0 0
        %978 = vmatpush1.bf16.msra.mxu0 0
        %979 = vmatprep.subr.bf16.mxu0 0
        %980 = vmatpush1.bf16.msra.mxu0 0
        %981 = vmatprep.subr.bf16.mxu0 0
        %982 = vmatpush1.bf16.msra.mxu0 0
        %983 = vmatprep.subr.bf16.mxu0 0
        %984 = vmatpush1.bf16.msra.mxu0 0
        %985 = vmatprep.mubr.bf16.mxu0 0
        %986 = vmatmul.mubr.bf16.gmra.mrb[0].mxu0 %v948
        %v987 = vpop.f32.mrb[0].mxu0
        %v988 = vadd.f32 0.0, %v987
        %v989 = vpop.f32.mrb[0].mxu0
        %v990 = vpop.f32.mrb[0].mxu0
        %v991 = vpop.f32.mrb[0].mxu0
        %992 = vdwg.mxu0
        %v994 = vsel %vm805, %v853, 0
        %v997 = vsel %vm857, %v610, 0
        %999 = vmatprep.subr.bf16.mxu0 0
        %1000 = vmatpush1.bf16.msra.mxu0 %v997
        %1001 = vmatprep.subr.bf16.mxu0 0
        %1002 = vmatpush1.bf16.msra.mxu0 0
        %1003 = vmatprep.subr.bf16.mxu0 0
        %1004 = vmatpush1.bf16.msra.mxu0 0
        %1005 = vmatprep.subr.bf16.mxu0 0
        %1006 = vmatpush1.bf16.msra.mxu0 0
        %1007 = vmatprep.subr.bf16.mxu0 0
        %1008 = vmatpush1.bf16.msra.mxu0 0
        %1009 = vmatprep.subr.bf16.mxu0 0
        %1010 = vmatpush1.bf16.msra.mxu0 0
        %1011 = vmatprep.subr.bf16.mxu0 0
        %1012 = vmatpush1.bf16.msra.mxu0 0
        %1013 = vmatprep.subr.bf16.mxu0 0
        %1014 = vmatpush1.bf16.msra.mxu0 0
        %1015 = vmatprep.subr.bf16.mxu0 0
        %1016 = vmatpush1.bf16.msra.mxu0 0
        %1017 = vmatprep.subr.bf16.mxu0 0
        %1018 = vmatpush1.bf16.msra.mxu0 0
        %1019 = vmatprep.subr.bf16.mxu0 0
        %1020 = vmatpush1.bf16.msra.mxu0 0
        %1021 = vmatprep.subr.bf16.mxu0 0
        %1022 = vmatpush1.bf16.msra.mxu0 0
        %1023 = vmatprep.subr.bf16.mxu0 0
        %1024 = vmatpush1.bf16.msra.mxu0 0
        %1025 = vmatprep.subr.bf16.mxu0 0
        %1026 = vmatpush1.bf16.msra.mxu0 0
        %1027 = vmatprep.subr.bf16.mxu0 0
        %1028 = vmatpush1.bf16.msra.mxu0 0
        %1029 = vmatprep.subr.bf16.mxu0 0
        %1030 = vmatpush1.bf16.msra.mxu0 0
        %1031 = vmatprep.mubr.bf16.mxu0 0
        %1032 = vmatmul.mubr.bf16.gmra.mrb[0].mxu0 %v994
        %v1033 = vpop.f32.mrb[0].mxu0
        %v1034 = vadd.f32 0.0, %v1033
        %v1035 = vpop.f32.mrb[0].mxu0
        %v1036 = vpop.f32.mrb[0].mxu0
        %v1037 = vpop.f32.mrb[0].mxu0
        %1038 = vdwg.mxu0
        %v1039 = vpack.c.bf16 %v896, %v896
        %v1040 = vpack.c.bf16 %v942, %v942
        %v1041 = vpack.c.bf16 %v988, %v988
        %v1042 = vpack.c.bf16 %v1034, %v1034
        %v1043 = vld [vmem:[#allocation8] sm:$0xf]
        %v1044 = vld [vmem:[#allocation8 + $0x4] sm:$0xf]
        %v1045 = vld [vmem:[#allocation8 + $0x8] sm:$0xf]
        %v1046 = vld [vmem:[#allocation8 + $0xc] sm:$0xf]
        %v1047 = vld [vmem:[#allocation8 + $0x10] sm:$0xf]
        %v1048 = vld [vmem:[#allocation8 + $0x14] sm:$0xf]
        %v1049 = vld [vmem:[#allocation8 + $0x18] sm:$0xf]
        %v1050 = vld [vmem:[#allocation8 + $0x1c] sm:$0xf]
        %v1053 = vunpack.c.l.b16 %v1043
        %v1054 = vunpack.c.l.b16 %v1044
        %v1055 = vpack.c.b16 %v1054, %v1053
        %v1058 = vsel %vm611, %v1039, 0
        %1060 = vmatprep.subr.bf16.mxu0 0
        %1061 = vmatpush1.bf16.msra.mxu0 %v1055
        %1062 = vmatprep.subr.bf16.mxu0 0
        %1063 = vmatpush1.bf16.msra.mxu0 0
        %1064 = vmatprep.subr.bf16.mxu0 0
        %1065 = vmatpush1.bf16.msra.mxu0 0
        %1066 = vmatprep.subr.bf16.mxu0 0
        %1067 = vmatpush1.bf16.msra.mxu0 0
        %1068 = vmatprep.subr.bf16.mxu0 0
        %1069 = vmatpush1.bf16.msra.mxu0 0
        %1070 = vmatprep.subr.bf16.mxu0 0
        %1071 = vmatpush1.bf16.msra.mxu0 0
        %1072 = vmatprep.subr.bf16.mxu0 0
        %1073 = vmatpush1.bf16.msra.mxu0 0
        %1074 = vmatprep.subr.bf16.mxu0 0
        %1075 = vmatpush1.bf16.msra.mxu0 0
        %1076 = vmatprep.subr.bf16.mxu0 0
        %1077 = vmatpush1.bf16.msra.mxu0 0
        %1078 = vmatprep.subr.bf16.mxu0 0
        %1079 = vmatpush1.bf16.msra.mxu0 0
        %1080 = vmatprep.subr.bf16.mxu0 0
        %1081 = vmatpush1.bf16.msra.mxu0 0
        %1082 = vmatprep.subr.bf16.mxu0 0
        %1083 = vmatpush1.bf16.msra.mxu0 0
        %1084 = vmatprep.subr.bf16.mxu0 0
        %1085 = vmatpush1.bf16.msra.mxu0 0
        %1086 = vmatprep.subr.bf16.mxu0 0
        %1087 = vmatpush1.bf16.msra.mxu0 0
        %1088 = vmatprep.subr.bf16.mxu0 0
        %1089 = vmatpush1.bf16.msra.mxu0 0
        %1090 = vmatprep.subr.bf16.mxu0 0
        %1091 = vmatpush1.bf16.msra.mxu0 0
        %1092 = vmatprep.mubr.bf16.mxu0 0
        %1093 = vmatmul.mubr.bf16.gmra.mrb[0].mxu0 %v1058
        %v1094 = vpop.f32.mrb[0].mxu0
        %v1095 = vadd.f32 0.0, %v1094
        %v1096 = vpop.f32.mrb[0].mxu0
        %v1097 = vpop.f32.mrb[0].mxu0
        %v1098 = vpop.f32.mrb[0].mxu0
        %1099 = vdwg.mxu0
        %v1102 = vunpack.c.l.b16 %v1045
        %v1103 = vunpack.c.l.b16 %v1046
        %v1104 = vpack.c.b16 %v1103, %v1102
        %v1107 = vsel %vm611, %v1040, 0
        %1109 = vmatprep.subr.bf16.mxu0 0
        %1110 = vmatpush1.bf16.msra.mxu0 %v1104
        %1111 = vmatprep.subr.bf16.mxu0 0
        %1112 = vmatpush1.bf16.msra.mxu0 0
        %1113 = vmatprep.subr.bf16.mxu0 0
        %1114 = vmatpush1.bf16.msra.mxu0 0
        %1115 = vmatprep.subr.bf16.mxu0 0
        %1116 = vmatpush1.bf16.msra.mxu0 0
        %1117 = vmatprep.subr.bf16.mxu0 0
        %1118 = vmatpush1.bf16.msra.mxu0 0
        %1119 = vmatprep.subr.bf16.mxu0 0
        %1120 = vmatpush1.bf16.msra.mxu0 0
        %1121 = vmatprep.subr.bf16.mxu0 0
        %1122 = vmatpush1.bf16.msra.mxu0 0
        %1123 = vmatprep.subr.bf16.mxu0 0
        %1124 = vmatpush1.bf16.msra.mxu0 0
        %1125 = vmatprep.subr.bf16.mxu0 0
        %1126 = vmatpush1.bf16.msra.mxu0 0
        %1127 = vmatprep.subr.bf16.mxu0 0
        %1128 = vmatpush1.bf16.msra.mxu0 0
        %1129 = vmatprep.subr.bf16.mxu0 0
        %1130 = vmatpush1.bf16.msra.mxu0 0
        %1131 = vmatprep.subr.bf16.mxu0 0
        %1132 = vmatpush1.bf16.msra.mxu0 0
        %1133 = vmatprep.subr.bf16.mxu0 0
        %1134 = vmatpush1.bf16.msra.mxu0 0
        %1135 = vmatprep.subr.bf16.mxu0 0
        %1136 = vmatpush1.bf16.msra.mxu0 0
        %1137 = vmatprep.subr.bf16.mxu0 0
        %1138 = vmatpush1.bf16.msra.mxu0 0
        %1139 = vmatprep.subr.bf16.mxu0 0
        %1140 = vmatpush1.bf16.msra.mxu0 0
        %1141 = vmatprep.mubr.bf16.mxu0 0
        %1142 = vmatmul.mubr.bf16.gmra.mrb[0].mxu0 %v1107
        %v1143 = vpop.f32.mrb[0].mxu0
        %v1144 = vadd.f32 0.0, %v1143
        %v1145 = vpop.f32.mrb[0].mxu0
        %v1146 = vpop.f32.mrb[0].mxu0
        %v1147 = vpop.f32.mrb[0].mxu0
        %1148 = vdwg.mxu0
        %v1151 = vunpack.c.l.b16 %v1047
        %v1152 = vunpack.c.l.b16 %v1048
        %v1153 = vpack.c.b16 %v1152, %v1151
        %v1156 = vsel %vm611, %v1041, 0
        %1158 = vmatprep.subr.bf16.mxu0 0
        %1159 = vmatpush1.bf16.msra.mxu0 %v1153
        %1160 = vmatprep.subr.bf16.mxu0 0
        %1161 = vmatpush1.bf16.msra.mxu0 0
        %1162 = vmatprep.subr.bf16.mxu0 0
        %1163 = vmatpush1.bf16.msra.mxu0 0
        %1164 = vmatprep.subr.bf16.mxu0 0
        %1165 = vmatpush1.bf16.msra.mxu0 0
        %1166 = vmatprep.subr.bf16.mxu0 0
        %1167 = vmatpush1.bf16.msra.mxu0 0
        %1168 = vmatprep.subr.bf16.mxu0 0
        %1169 = vmatpush1.bf16.msra.mxu0 0
        %1170 = vmatprep.subr.bf16.mxu0 0
        %1171 = vmatpush1.bf16.msra.mxu0 0
        %1172 = vmatprep.subr.bf16.mxu0 0
        %1173 = vmatpush1.bf16.msra.mxu0 0
        %1174 = vmatprep.subr.bf16.mxu0 0
        %1175 = vmatpush1.bf16.msra.mxu0 0
        %1176 = vmatprep.subr.bf16.mxu0 0
        %1177 = vmatpush1.bf16.msra.mxu0 0
        %1178 = vmatprep.subr.bf16.mxu0 0
        %1179 = vmatpush1.bf16.msra.mxu0 0
        %1180 = vmatprep.subr.bf16.mxu0 0
        %1181 = vmatpush1.bf16.msra.mxu0 0
        %1182 = vmatprep.subr.bf16.mxu0 0
        %1183 = vmatpush1.bf16.msra.mxu0 0
        %1184 = vmatprep.subr.bf16.mxu0 0
        %1185 = vmatpush1.bf16.msra.mxu0 0
        %1186 = vmatprep.subr.bf16.mxu0 0
        %1187 = vmatpush1.bf16.msra.mxu0 0
        %1188 = vmatprep.subr.bf16.mxu0 0
        %1189 = vmatpush1.bf16.msra.mxu0 0
        %1190 = vmatprep.mubr.bf16.mxu0 0
        %1191 = vmatmul.mubr.bf16.gmra.mrb[0].mxu0 %v1156
        %v1192 = vpop.f32.mrb[0].mxu0
        %v1193 = vadd.f32 0.0, %v1192
        %v1194 = vpop.f32.mrb[0].mxu0
        %v1195 = vpop.f32.mrb[0].mxu0
        %v1196 = vpop.f32.mrb[0].mxu0
        %1197 = vdwg.mxu0
        %v1200 = vunpack.c.l.b16 %v1049
        %v1201 = vunpack.c.l.b16 %v1050
        %v1202 = vpack.c.b16 %v1201, %v1200
        %v1205 = vsel %vm611, %v1042, 0
        %1207 = vmatprep.subr.bf16.mxu0 0
        %1208 = vmatpush1.bf16.msra.mxu0 %v1202
        %1209 = vmatprep.subr.bf16.mxu0 0
        %1210 = vmatpush1.bf16.msra.mxu0 0
        %1211 = vmatprep.subr.bf16.mxu0 0
        %1212 = vmatpush1.bf16.msra.mxu0 0
        %1213 = vmatprep.subr.bf16.mxu0 0
        %1214 = vmatpush1.bf16.msra.mxu0 0
        %1215 = vmatprep.subr.bf16.mxu0 0
        %1216 = vmatpush1.bf16.msra.mxu0 0
        %1217 = vmatprep.subr.bf16.mxu0 0
        %1218 = vmatpush1.bf16.msra.mxu0 0
        %1219 = vmatprep.subr.bf16.mxu0 0
        %1220 = vmatpush1.bf16.msra.mxu0 0
        %1221 = vmatprep.subr.bf16.mxu0 0
        %1222 = vmatpush1.bf16.msra.mxu0 0
        %1223 = vmatprep.subr.bf16.mxu0 0
        %1224 = vmatpush1.bf16.msra.mxu0 0
        %1225 = vmatprep.subr.bf16.mxu0 0
        %1226 = vmatpush1.bf16.msra.mxu0 0
        %1227 = vmatprep.subr.bf16.mxu0 0
        %1228 = vmatpush1.bf16.msra.mxu0 0
        %1229 = vmatprep.subr.bf16.mxu0 0
        %1230 = vmatpush1.bf16.msra.mxu0 0
        %1231 = vmatprep.subr.bf16.mxu0 0
        %1232 = vmatpush1.bf16.msra.mxu0 0
        %1233 = vmatprep.subr.bf16.mxu0 0
        %1234 = vmatpush1.bf16.msra.mxu0 0
        %1235 = vmatprep.subr.bf16.mxu0 0
        %1236 = vmatpush1.bf16.msra.mxu0 0
        %1237 = vmatprep.subr.bf16.mxu0 0
        %1238 = vmatpush1.bf16.msra.mxu0 0
        %1239 = vmatprep.mubr.bf16.mxu0 0
        %1240 = vmatmul.mubr.bf16.gmra.mrb[0].mxu0 %v1205
        %v1241 = vpop.f32.mrb[0].mxu0
        %v1242 = vadd.f32 0.0, %v1241
        %v1243 = vpop.f32.mrb[0].mxu0
        %v1244 = vpop.f32.mrb[0].mxu0
        %v1245 = vpop.f32.mrb[0].mxu0
        %1246 = vdwg.mxu0
        %v1247 = vsel %vm407, %v1095, 0.0
        %v1248 = vsel %vm407, %v1144, 0.0
        %v1249 = vadd.f32 %v1247, %v1248
        %v1250 = vsel %vm407, %v1193, 0.0
        %v1251 = vadd.f32 %v1249, %v1250
        %v1252 = vsel %vm407, %v1242, 0.0
        %v1253 = vadd.f32 %v1251, %v1252
        %v1254 = vld [vmem:[%s7] sm:$0x1]
        %v1255 = vsel %vm407, %v1253, 0.0
        %1256 = vadd.xlane.f32.xlu0 %v1255
        %v1257 = vpop.xlane.xlu0 %1256
        %v1258 = vmul.f32 %v1257, %v411
        %v1259 = vsub.f32 %v1253, %v1258
        %v1260 = vmul.f32 %v1259, %v1259
        %v1261 = vsel %vm407, %v1260, 0.0
        %1262 = vadd.xlane.f32.xlu0 %v1261
        %v1263 = vpop.xlane.xlu0 %1262
        %v1264 = vmul.f32 %v1263, %v411
        %v1265 = vadd.f32 %v1264, 1e-05
        %v1266 = vrsqrt.pop %v1265
        %v1267 = vmul.f32 %v1259, %v1266
        %v1269 = vlaneseq
        %v1270 = vshrl.u32 %v1269, 7
        %v1271 = vsub.s32 0, %v1270
        %v1272 = vrot.slane %v1254, %v1271
        %v1274 = vmul.f32 %v1267, %v1272
        %1275 = vst.msk [vmem:[%s403] sm:$0xff] %vm407, %v1274
        %s1276 = sand.u32 %s231, 1
        %s1277 = scalar_lea.sflag [#allocation4], %s1276
        %s1278 = sand.u32 %s231, 1
        %s1279 = smul.addr %s1278, 8
        %s1280 = scalar_lea.vmem [#allocation10], %s1279
        // Predicated region
        $region69: #{tpu_custom_call.1} parent=51 // pred_check
          %p1281 = pneg %p241
        $region70: #{tpu_custom_call.1} parent=51 // pred_check_branch
          %1283 = sbr.rel (%p1281) target = $region72
        $region71: #{tpu_custom_call.1} parent=51 // pred_region
          %s1285 = ssub.s32 128, 128
          %1286 = vsyncadd %s1277, %s1285
          %s1287 = sadd.s32 %s34, %s33
          %s1288 = smul.addr %s1287, 128
          %s1289 = scalar_lea.hbm %s8, %s1288
          %s1291 = sshll.u32 %s1280, 4
          %s1292 = int_to_ptr.vmem [resolvable:$true] %s1291
          %1294 = dma.vmem_to_hbm [thread:$0]  %s1292, 128, %s1289, %s1277
        $region72: #{tpu_custom_call.1} parent=51 // pred_fallthru
          _
      $region52: #{tpu_custom_call.1} parent=5 // pred_fallthru
        _
      %p1295 = scmp.le.s32.totalorder 2, %s24
      // Predicated region
      $region73: #{tpu_custom_call.1} parent=5 // pred_check
        %p1296 = pneg %p1295
      $region74: #{tpu_custom_call.1} parent=5 // pred_check_branch
        %1298 = sbr.rel (%p1296) target = $region76
      $region75: #{tpu_custom_call.1} parent=5 // pred_region
        %s1299 = ssub.s32 %s24, 2
        // Predicated region
        $region77: #{tpu_custom_call.1} parent=75 // pred_check
          %p1300 = pneg %p247
        $region78: #{tpu_custom_call.1} parent=75 // pred_check_branch
          %1302 = sbr.rel (%p1300) target = $region80
        $region79: #{tpu_custom_call.1} parent=75 // pred_region
          %s1303 = sand.u32 %s232, 1
          %s1304 = scalar_lea.sflag [#allocation4], %s1303
          %s1305 = sand.u32 %s232, 1
          %s1306 = smul.addr %s1305, 8
          %s1307 = scalar_lea.vmem [#allocation10], %s1306
          %1308 = dma.done %s1304, 128
        $region80: #{tpu_custom_call.1} parent=75 // pred_fallthru
          _
      $region76: #{tpu_custom_call.1} parent=5 // pred_fallthru
        _
    $region6: #{tpu_custom_call.1} parent=1 // loop_footer
      %s28 = sadd.s32 1, %s24
    $region7: #{tpu_custom_call.1} parent=1 // loop_footer_branch
      %23 = sbr.rel target = $region3
    $region8: #{tpu_custom_call.1} parent=1 // loop_exit
      _
    %1309 = vsyncpa [#allocation3], 1
    %s1310 = scalar_lea.sflag [#allocation3], 1
    %1311 = vsyncpa %s1310, 1
    %1312 = vsyncpa [#allocation6], 1
    %s1313 = scalar_lea.sflag [#allocation6], 1
    %1314 = vsyncpa %s1313, 1
    %1315 = vsyncpa [#allocation9], 1
    %1316 = vsyncpa [#allocation4], 1
    %s1317 = scalar_lea.sflag [#allocation4], 1
    %1318 = vsyncpa %s1317, 1

</llo_original>
